<compile_context>
chip_gen: v7x
topology: tpu7x:2x2x1
jax: 0.10.0
libtpu: 0.0.40
codegen_flags: <defaults>
</compile_context>

<pallas_src>
import functools

import jax
import jax.numpy as jnp
from jax.experimental import pallas as pl
from jax.experimental.pallas import tpu as pltpu


def tree_encoder_kernel(nf_ref, keep_ref, w_nf_ref, b_nf_ref, w_hid_ref,
                        hc_ref, msg_ref, *, depth):
    """One grid step = one lane-pack of P trees (P*H = 128 lanes).

    nf_ref   : [1, n, P*V]       packed node features (tree-major in lanes)
    keep_ref : [1, n*n, P*H]     0/1 connectivity mask, broadcast over H
    w_nf_ref : [P*V, 4*P*H]      block-diag nf->H weights, gates (z,r,h,o) in lanes
    b_nf_ref : [1, 4*P*H]        fused biases (bz, bur, bh, bo), tree-broadcast
    w_hid_ref: [P*H, 4*P*H]      block-diag hidden weights [wz_h | ur | wh_h | wo_h]
    hc_ref   : [1, n, P*H]       ReLU(outputNN) for every node
    msg_ref  : [1, n*n, P*H]     final messages (row i*n+j = message[i, j])
    """
    f32 = jnp.float32
    n = nf_ref.shape[1]
    nn = keep_ref.shape[1]
    PH = keep_ref.shape[2]

    nf = nf_ref[...].reshape(n, -1).astype(f32)        # [n, P*V]
    keep = keep_ref[...].reshape(nn, PH)                # [n*n, P*H]

    # ---------------- hoisted, loop-invariant work ----------------
    # One lane-dense matmul gives all four nf->H projections (+ all biases).
    nf_proj = jnp.dot(nf, w_nf_ref[...], preferred_element_type=f32) + b_nf_ref[...]
    zc_base = nf_proj[:, 0 * PH:1 * PH]    # nf @ wz_v + bz
    rc_base = nf_proj[:, 1 * PH:2 * PH]    # nf @ wr   + bur
    hc_base = nf_proj[:, 2 * PH:3 * PH]    # nf @ wh_v + bh
    oc_base = nf_proj[:, 3 * PH:4 * PH]    # nf @ wo_v + bo

    w_hid = w_hid_ref[...]
    w_msg = w_hid[:, 0:2 * PH]             # [wz_h | ur] fused: one matmul on message
    w_hh = w_hid[:, 2 * PH:3 * PH]         # wh_h
    w_oh = w_hid[:, 3 * PH:4 * PH]         # wo_h

    def tile_rows(x):
        # [n, PH] -> [n*n, PH], row (i*n + j) = x[j].  Groups of n=8 rows map onto
        # whole sublane tiles, so the reshape is layout-preserving.
        return jnp.broadcast_to(x[None], (n, n, PH)).reshape(nn, PH)

    # r-gate node-feature term is loop invariant -> broadcast once.
    rc_tile = tile_rows(rc_base)                        # [n*n, PH]

    # ---------------- GraphGRU loop (2-D [n*n, P*H] lane-dense state) -------------
    # depth is small & static -> Python unroll (scheduler visibility).
    message = jnp.zeros((nn, PH), f32)
    for _ in range(depth):
        # Single fused matmul on the state: [message @ wz_h | message @ ur].
        m2 = jnp.dot(message, w_msg, preferred_element_type=f32)   # [n*n, 2*PH]
        m_wz = m2[:, :PH]
        m_ur = m2[:, PH:]

        # Neighbor sum S[j] = sum_k message[j, k]  (per-tile sublane reduce).
        S = jnp.sum(message.reshape(n, n, PH), axis=1)             # [n, PH]
        # (S @ wz_h)[j] == sum_k m_wz[j, k]  -> pure sublane reduce, no extra MXU op.
        s_wz = jnp.sum(m_wz.reshape(n, n, PH), axis=1)             # [n, PH]

        # z = sigmoid(nf@wz_v + bz + (S - message) @ wz_h)
        z = jax.nn.sigmoid(tile_rows(zc_base + s_wz) - m_wz)       # [n*n, PH]

        # r = sigmoid(nf@wr + bur + message@ur)
        r = jax.nn.sigmoid(rc_tile + m_ur)                         # [n*n, PH]

        # sum_gated_h[j] = sum_i (r * message)[i, j]  (cross-tile vreg adds).
        sgh = jnp.sum((r * message).reshape(n, n, PH), axis=0)     # [n, PH]
        m_h = jnp.tanh(hc_base + jnp.dot(sgh, w_hh,
                                         preferred_element_type=f32))  # [n, PH]

        mns = tile_rows(S) - message                               # [n*n, PH]
        message = ((1.0 - z) * mns + z * tile_rows(m_h)) * keep

    # Lane-dense (unmasked) store of the final messages.
    msg_ref[...] = message.reshape(1, nn, PH)

    # ------------- outputNN: ReLU(Linear([nf, sum1 + sum0])) ----------------------
    m3 = message.reshape(n, n, PH)
    total = jnp.sum(m3, axis=1) + jnp.sum(m3, axis=0)              # [n, PH]
    out = jnp.maximum(
        oc_base + jnp.dot(total, w_oh, preferred_element_type=f32), 0.0)
    hc_ref[...] = out.reshape(1, n, PH)


def tree_encoder_batched(node_features, masks, params, depth):
    """Batch of trees: node_features [B, n, V], masks [B, n, n].

    Returns (hidden_code_node0 [B, H], messages [B, n, n, H]).
    """
    B, n, V = node_features.shape
    H = params["wz_h"].shape[0]
    P = max(1, 128 // H)             # trees lane-packed per grid step (4 for H=32)
    G = -(-B // P)                   # grid steps (packs); batch padded to G*P trees
    Bp = G * P
    PH = P * H

    # ---- pure layout prep in the wrapper (pad, lane-pack, block-diag weights) ----
    nf = jnp.zeros((Bp, n, V), jnp.float32).at[:B].set(node_features.astype(jnp.float32))
    mk = jnp.zeros((Bp, n, n), jnp.float32).at[:B].set((masks > 0).astype(jnp.float32))

    # Lane-pack P trees per row: tree-major within lanes.
    nf_p = nf.reshape(G, P, n, V).transpose(0, 2, 1, 3).reshape(G, n, P * V)
    keep_p = jnp.broadcast_to(
        mk.reshape(G, P, n, n).transpose(0, 2, 3, 1)[..., None],
        (G, n, n, P, H)).reshape(G, n * n, PH)

    # Per-tree (block-diagonal) weight slabs; gate order everywhere: z, r, h, o.
    w_nf = jnp.stack([params["wz_v"], params["wr"], params["wh_v"], params["wo_v"]],
                     axis=1)                                            # [V, 4, H]
    b_nf = jnp.stack([params["bz"][0], params["bur"][0], params["bh"][0],
                      params["bo"][0]], axis=0)                         # [4, H]
    w_hid = jnp.stack([params["wz_h"], params["ur"], params["wh_h"], params["wo_h"]],
                      axis=1)                                           # [H, 4, H]
    eye = jnp.eye(P, dtype=jnp.float32)
    w_nf_bd = jnp.einsum("ts,vgh->tvgsh", eye, w_nf).reshape(P * V, 4 * PH)
    w_hid_bd = jnp.einsum("ts,hgk->thgsk", eye, w_hid).reshape(PH, 4 * PH)
    b_nf_p = jnp.broadcast_to(b_nf[:, None, :], (4, P, H)).reshape(1, 4 * PH)

    hc_p, msg_p = pl.pallas_call(
        functools.partial(tree_encoder_kernel, depth=depth),
        grid=(G,),
        in_specs=[
            pl.BlockSpec((1, n, P * V), lambda g: (g, 0, 0)),       # packed node features
            pl.BlockSpec((1, n * n, PH), lambda g: (g, 0, 0)),      # packed keep mask
            pl.BlockSpec((P * V, 4 * PH), lambda g: (0, 0)),        # block-diag nf weights
            pl.BlockSpec((1, 4 * PH), lambda g: (0, 0)),            # fused biases
            pl.BlockSpec((PH, 4 * PH), lambda g: (0, 0)),           # block-diag hidden weights
        ],
        out_specs=(
            pl.BlockSpec((1, n, PH), lambda g: (g, 0, 0)),
            pl.BlockSpec((1, n * n, PH), lambda g: (g, 0, 0)),
        ),
        out_shape=(jax.ShapeDtypeStruct((G, n, PH), jnp.float32),
                   jax.ShapeDtypeStruct((G, n * n, PH), jnp.float32)),
        compiler_params=pltpu.CompilerParams(
            dimension_semantics=("parallel",)),                     # 2nd TC on v7x
    )(nf_p, keep_p, w_nf_bd, b_nf_p, w_hid_bd)

    # ---- unpack lanes back to per-tree tensors (wrapper-side, free) ----
    hc = hc_p.reshape(G, n, P, H).transpose(0, 2, 1, 3).reshape(Bp, n, H)[:B]
    messages = (msg_p.reshape(G, n, n, P, H).transpose(0, 3, 1, 2, 4)
                .reshape(Bp, n, n, H)[:B])
    # PyTorch module returns (hidden_code[0], messages).
    return hc[:, 0, :], messages


def tree_encoder(node_feature, mask, params, depth):
    """Single tree (exact TreeEncoder.forward semantics)."""
    hc0, messages = tree_encoder_batched(node_feature[None], mask[None], params, depth)
    return hc0[0], messages[0]


def tree_encoder_ref(node_feature, mask, params, depth):
    """Pure-JAX reference, direct transcription of the PyTorch forward."""
    n, V = node_feature.shape
    H = params["wz_h"].shape[0]
    keep = (mask > 0).astype(jnp.float32)[:, :, None]
    message = jnp.zeros((n, n, H), jnp.float32)
    nf = node_feature
    for _ in range(depth):
        S = message.sum(axis=1)
        mns = S[None, :, :] - message
        nf_rep = jnp.broadcast_to(nf[None, :, :], (n, n, V))
        z_in = jnp.concatenate([nf_rep, mns], axis=2)
        Wz = jnp.concatenate([params["wz_v"], params["wz_h"]], axis=0)
        z = jax.nn.sigmoid(z_in @ Wz + params["bz"][0])
        r1 = nf @ params["wr"]
        r2 = message @ params["ur"] + params["bur"][0]
        r = jax.nn.sigmoid(r1[None, :, :] + r2)
        sgh = (r * message).sum(axis=0)
        Wh = jnp.concatenate([params["wh_v"], params["wh_h"]], axis=0)
        m_h = jnp.tanh(jnp.concatenate([nf, sgh], axis=1) @ Wh + params["bh"][0])
        message = (1.0 - z) * mns + z * m_h[None, :, :]
        message = message * keep
    mns_final = message.sum(axis=1) + message.sum(axis=0)
    Wo = jnp.concatenate([params["wo_v"], params["wo_h"]], axis=0)
    hc = jnp.maximum(jnp.concatenate([nf, mns_final], axis=1) @ Wo + params["bo"][0], 0.0)
    return hc[0], message


def init_params(key, vocab_size, hidden_size):
    V, H = vocab_size, hidden_size
    ks = jax.random.split(key, 8)
    u = lambda k, shape, fan_in: jax.random.uniform(
        k, shape, jnp.float32, -1.0 / jnp.sqrt(fan_in), 1.0 / jnp.sqrt(fan_in))
    # PyTorch Linear weights are [out, in]; store pre-transposed [in, out] and
    # pre-split along the concat axis ([nodeFeature, hidden]).
    wz = u(ks[0], (V + H, H), V + H)
    wh = u(ks[1], (V + H, H), V + H)
    wo = u(ks[2], (V + H, H), V + H)
    return {
        "wz_v": wz[:V], "wz_h": wz[V:], "bz": u(ks[3], (1, H), V + H),
        "wr": u(ks[4], (V, H), V),                       # bias=False
        "ur": u(ks[5], (H, H), H), "bur": u(ks[6], (1, H), H),
        "wh_v": wh[:V], "wh_h": wh[V:], "bh": u(ks[7], (1, H), V + H),
        "wo_v": wo[:V], "wo_h": wo[V:], "bo": jnp.zeros((1, H), jnp.float32),
    }


if __name__ == "__main__":
    n = 8            # number of tree nodes (treeGraph.n)
    vocab_size = 8
    hidden_size = 32
    max_depth = 3
    batch = 8        # trees per pallas_call: 2 lane-packs of 4, parallel grid axis

    key = jax.random.PRNGKey(0)
    k_nf, k_mask, k_par = jax.random.split(key, 3)

    node_features = jax.random.normal(k_nf, (batch, n, vocab_size), jnp.float32)
    masks = (jax.random.uniform(k_mask, (batch, n, n)) > 0.5).astype(jnp.float32)
    params = init_params(k_par, vocab_size, hidden_size)

    # Batched kernel (amortizes launch + DMA overhead across trees).
    hc0, messages = tree_encoder_batched(node_features, masks, params, max_depth)
    jax.block_until_ready((hc0, messages))

    for b in range(batch):
        hc_ref_b, msg_ref_b = tree_encoder_ref(node_features[b], masks[b], params, max_depth)
        assert jnp.allclose(hc0[b], hc_ref_b, atol=1e-4, rtol=1e-4)
        assert jnp.allclose(messages[b], msg_ref_b, atol=1e-4, rtol=1e-4)

    # Single-tree entry point (exact module semantics: hidden_code[0], messages).
    hc_single, msg_single = tree_encoder(node_features[0], masks[0], params, max_depth)
    jax.block_until_ready((hc_single, msg_single))
    assert jnp.allclose(hc_single, hc0[0], atol=1e-5, rtol=1e-5)
    assert jnp.allclose(msg_single, messages[0], atol=1e-5, rtol=1e-5)

    print("KERNEL_OK")
</pallas_src>

<mosaic_0001>
module attributes {stable_mosaic.version = 11 : i64} {
  func.func @tree_encoder_kernel(%arg0: i32, %arg1: memref<1x8x32xf32, #tpu.memory_space<vmem>>, %arg2: memref<1x64x128xf32, #tpu.memory_space<vmem>>, %arg3: memref<32x512xf32, #tpu.memory_space<vmem>>, %arg4: memref<1x512xf32, #tpu.memory_space<vmem>>, %arg5: memref<128x512xf32, #tpu.memory_space<vmem>>, %arg6: memref<1x8x128xf32, #tpu.memory_space<vmem>>, %arg7: memref<1x64x128xf32, #tpu.memory_space<vmem>>) attributes {dimension_semantics = [#tpu.dimension_semantics<parallel>], iteration_bounds = array<i64: 2>, scalar_prefetch = 0 : i64, scratch_operands = 0 : i64, tpu.core_type = #tpu.core_type<tc>, window_params = [{transform_indices = @transform_0, window_bounds = array<i64: 1, 8, 32>}, {transform_indices = @transform_1, window_bounds = array<i64: 1, 64, 128>}, {pipeline_mode = #tpu.pipeline_mode<synchronous>, transform_indices = @transform_2, window_bounds = array<i64: 32, 512>}, {pipeline_mode = #tpu.pipeline_mode<synchronous>, transform_indices = @transform_3, window_bounds = array<i64: 1, 512>}, {pipeline_mode = #tpu.pipeline_mode<synchronous>, transform_indices = @transform_4, window_bounds = array<i64: 128, 512>}, {transform_indices = @transform_5, window_bounds = array<i64: 1, 8, 128>}, {transform_indices = @transform_6, window_bounds = array<i64: 1, 64, 128>}]} {
    %c0 = arith.constant 0 : index
    %c0_0 = arith.constant 0 : index
    %c0_1 = arith.constant 0 : index
    %0 = vector.load %arg1[%c0, %c0_0, %c0_1] : memref<1x8x32xf32, #tpu.memory_space<vmem>>, vector<1x8x32xf32>
    %1 = vector.shape_cast %0 : vector<1x8x32xf32> to vector<8x32xf32>
    %c0_2 = arith.constant 0 : index
    %c0_3 = arith.constant 0 : index
    %c0_4 = arith.constant 0 : index
    %2 = vector.load %arg2[%c0_2, %c0_3, %c0_4] : memref<1x64x128xf32, #tpu.memory_space<vmem>>, vector<1x64x128xf32>
    %3 = vector.shape_cast %2 : vector<1x64x128xf32> to vector<64x128xf32>
    %c0_5 = arith.constant 0 : index
    %c0_6 = arith.constant 0 : index
    %4 = vector.load %arg3[%c0_5, %c0_6] : memref<32x512xf32, #tpu.memory_space<vmem>>, vector<32x512xf32>
    %cst = arith.constant dense<0.000000e+00> : vector<8x512xf32>
    %5 = tpu.matmul %1, %4, %cst {dimension_numbers = #tpu.dot_dimension_numbers<[1], [0], [0], [1], [0, 0, 1, 1], [], []>} : vector<8x32xf32>, vector<32x512xf32>, vector<8x512xf32> -> vector<8x512xf32>
    %c0_7 = arith.constant 0 : index
    %c0_8 = arith.constant 0 : index
    %6 = vector.load %arg4[%c0_7, %c0_8] : memref<1x512xf32, #tpu.memory_space<vmem>>, vector<1x512xf32>
    %7 = vector.broadcast %6 : vector<1x512xf32> to vector<8x512xf32>
    %8 = arith.addf %5, %7 : vector<8x512xf32>
    %9 = vector.extract_strided_slice %8 {offsets = [0, 0], sizes = [8, 128], strides = [1, 1]} : vector<8x512xf32> to vector<8x128xf32>
    %10 = vector.extract_strided_slice %8 {offsets = [0, 128], sizes = [8, 128], strides = [1, 1]} : vector<8x512xf32> to vector<8x128xf32>
    %11 = vector.extract_strided_slice %8 {offsets = [0, 256], sizes = [8, 128], strides = [1, 1]} : vector<8x512xf32> to vector<8x128xf32>
    %12 = vector.extract_strided_slice %8 {offsets = [0, 384], sizes = [8, 128], strides = [1, 1]} : vector<8x512xf32> to vector<8x128xf32>
    %c0_9 = arith.constant 0 : index
    %c0_10 = arith.constant 0 : index
    %13 = vector.load %arg5[%c0_9, %c0_10] : memref<128x512xf32, #tpu.memory_space<vmem>>, vector<128x512xf32>
    %14 = vector.extract_strided_slice %13 {offsets = [0, 0], sizes = [128, 256], strides = [1, 1]} : vector<128x512xf32> to vector<128x256xf32>
    %15 = vector.extract_strided_slice %13 {offsets = [0, 256], sizes = [128, 128], strides = [1, 1]} : vector<128x512xf32> to vector<128x128xf32>
    %16 = vector.extract_strided_slice %13 {offsets = [0, 384], sizes = [128, 128], strides = [1, 1]} : vector<128x512xf32> to vector<128x128xf32>
    %17 = vector.shape_cast %10 : vector<8x128xf32> to vector<1x8x128xf32>
    %18 = vector.shape_cast %17 : vector<1x8x128xf32> to vector<1x8x128xf32>
    %19 = vector.broadcast %18 : vector<1x8x128xf32> to vector<8x8x128xf32>
    %20 = vector.shape_cast %19 : vector<8x8x128xf32> to vector<64x128xf32>
    %cst_11 = arith.constant 0.000000e+00 : f32
    %21 = vector.broadcast %cst_11 : f32 to vector<64x128xf32>
    %cst_12 = arith.constant dense<0.000000e+00> : vector<64x256xf32>
    %22 = tpu.matmul %21, %14, %cst_12 {dimension_numbers = #tpu.dot_dimension_numbers<[1], [0], [0], [1], [0, 0, 1, 1], [], []>} : vector<64x128xf32>, vector<128x256xf32>, vector<64x256xf32> -> vector<64x256xf32>
    %23 = vector.extract_strided_slice %22 {offsets = [0, 0], sizes = [64, 128], strides = [1, 1]} : vector<64x256xf32> to vector<64x128xf32>
    %24 = vector.extract_strided_slice %22 {offsets = [0, 128], sizes = [64, 128], strides = [1, 1]} : vector<64x256xf32> to vector<64x128xf32>
    %25 = vector.shape_cast %21 : vector<64x128xf32> to vector<8x8x128xf32>
    %cst_13 = arith.constant dense<0.000000e+00> : vector<8x128xf32>
    %26 = vector.multi_reduction <add>, %25, %cst_13 [1] : vector<8x8x128xf32> to vector<8x128xf32>
    %27 = vector.shape_cast %23 : vector<64x128xf32> to vector<8x8x128xf32>
    %cst_14 = arith.constant dense<0.000000e+00> : vector<8x128xf32>
    %28 = vector.multi_reduction <add>, %27, %cst_14 [1] : vector<8x8x128xf32> to vector<8x128xf32>
    %29 = arith.addf %9, %28 : vector<8x128xf32>
    %30 = vector.shape_cast %29 : vector<8x128xf32> to vector<1x8x128xf32>
    %31 = vector.shape_cast %30 : vector<1x8x128xf32> to vector<1x8x128xf32>
    %32 = vector.broadcast %31 : vector<1x8x128xf32> to vector<8x8x128xf32>
    %33 = vector.shape_cast %32 : vector<8x8x128xf32> to vector<64x128xf32>
    %34 = arith.subf %33, %23 : vector<64x128xf32>
    %35 = arith.negf %34 : vector<64x128xf32>
    %36 = math.exp %35 : vector<64x128xf32>
    %cst_15 = arith.constant 1.000000e+00 : f32
    %37 = vector.broadcast %cst_15 : f32 to vector<64x128xf32>
    %38 = arith.addf %37, %36 : vector<64x128xf32>
    %39 = arith.divf %37, %38 : vector<64x128xf32>
    %40 = arith.addf %20, %24 : vector<64x128xf32>
    %41 = arith.negf %40 : vector<64x128xf32>
    %42 = math.exp %41 : vector<64x128xf32>
    %cst_16 = arith.constant 1.000000e+00 : f32
    %43 = vector.broadcast %cst_16 : f32 to vector<64x128xf32>
    %44 = arith.addf %43, %42 : vector<64x128xf32>
    %45 = arith.divf %43, %44 : vector<64x128xf32>
    %46 = arith.mulf %45, %21 : vector<64x128xf32>
    %47 = vector.shape_cast %46 : vector<64x128xf32> to vector<8x8x128xf32>
    %cst_17 = arith.constant dense<0.000000e+00> : vector<8x128xf32>
    %48 = vector.multi_reduction <add>, %47, %cst_17 [0] : vector<8x8x128xf32> to vector<8x128xf32>
    %cst_18 = arith.constant dense<0.000000e+00> : vector<8x128xf32>
    %49 = tpu.matmul %48, %15, %cst_18 {dimension_numbers = #tpu.dot_dimension_numbers<[1], [0], [0], [1], [0, 0, 1, 1], [], []>} : vector<8x128xf32>, vector<128x128xf32>, vector<8x128xf32> -> vector<8x128xf32>
    %50 = arith.addf %11, %49 : vector<8x128xf32>
    %51 = math.tanh %50 : vector<8x128xf32>
    %52 = vector.shape_cast %26 : vector<8x128xf32> to vector<1x8x128xf32>
    %53 = vector.shape_cast %52 : vector<1x8x128xf32> to vector<1x8x128xf32>
    %54 = vector.broadcast %53 : vector<1x8x128xf32> to vector<8x8x128xf32>
    %55 = vector.shape_cast %54 : vector<8x8x128xf32> to vector<64x128xf32>
    %56 = arith.subf %55, %21 : vector<64x128xf32>
    %cst_19 = arith.constant 1.000000e+00 : f32
    %57 = vector.broadcast %cst_19 : f32 to vector<64x128xf32>
    %58 = arith.subf %57, %39 : vector<64x128xf32>
    %59 = arith.mulf %58, %56 : vector<64x128xf32>
    %60 = vector.shape_cast %51 : vector<8x128xf32> to vector<1x8x128xf32>
    %61 = vector.shape_cast %60 : vector<1x8x128xf32> to vector<1x8x128xf32>
    %62 = vector.broadcast %61 : vector<1x8x128xf32> to vector<8x8x128xf32>
    %63 = vector.shape_cast %62 : vector<8x8x128xf32> to vector<64x128xf32>
    %64 = arith.mulf %39, %63 : vector<64x128xf32>
    %65 = arith.addf %59, %64 : vector<64x128xf32>
    %66 = arith.mulf %65, %3 : vector<64x128xf32>
    %cst_20 = arith.constant dense<0.000000e+00> : vector<64x256xf32>
    %67 = tpu.matmul %66, %14, %cst_20 {dimension_numbers = #tpu.dot_dimension_numbers<[1], [0], [0], [1], [0, 0, 1, 1], [], []>} : vector<64x128xf32>, vector<128x256xf32>, vector<64x256xf32> -> vector<64x256xf32>
    %68 = vector.extract_strided_slice %67 {offsets = [0, 0], sizes = [64, 128], strides = [1, 1]} : vector<64x256xf32> to vector<64x128xf32>
    %69 = vector.extract_strided_slice %67 {offsets = [0, 128], sizes = [64, 128], strides = [1, 1]} : vector<64x256xf32> to vector<64x128xf32>
    %70 = vector.shape_cast %66 : vector<64x128xf32> to vector<8x8x128xf32>
    %cst_21 = arith.constant dense<0.000000e+00> : vector<8x128xf32>
    %71 = vector.multi_reduction <add>, %70, %cst_21 [1] : vector<8x8x128xf32> to vector<8x128xf32>
    %72 = vector.shape_cast %68 : vector<64x128xf32> to vector<8x8x128xf32>
    %cst_22 = arith.constant dense<0.000000e+00> : vector<8x128xf32>
    %73 = vector.multi_reduction <add>, %72, %cst_22 [1] : vector<8x8x128xf32> to vector<8x128xf32>
    %74 = arith.addf %9, %73 : vector<8x128xf32>
    %75 = vector.shape_cast %74 : vector<8x128xf32> to vector<1x8x128xf32>
    %76 = vector.shape_cast %75 : vector<1x8x128xf32> to vector<1x8x128xf32>
    %77 = vector.broadcast %76 : vector<1x8x128xf32> to vector<8x8x128xf32>
    %78 = vector.shape_cast %77 : vector<8x8x128xf32> to vector<64x128xf32>
    %79 = arith.subf %78, %68 : vector<64x128xf32>
    %80 = arith.negf %79 : vector<64x128xf32>
    %81 = math.exp %80 : vector<64x128xf32>
    %cst_23 = arith.constant 1.000000e+00 : f32
    %82 = vector.broadcast %cst_23 : f32 to vector<64x128xf32>
    %83 = arith.addf %82, %81 : vector<64x128xf32>
    %84 = arith.divf %82, %83 : vector<64x128xf32>
    %85 = arith.addf %20, %69 : vector<64x128xf32>
    %86 = arith.negf %85 : vector<64x128xf32>
    %87 = math.exp %86 : vector<64x128xf32>
    %cst_24 = arith.constant 1.000000e+00 : f32
    %88 = vector.broadcast %cst_24 : f32 to vector<64x128xf32>
    %89 = arith.addf %88, %87 : vector<64x128xf32>
    %90 = arith.divf %88, %89 : vector<64x128xf32>
    %91 = arith.mulf %90, %66 : vector<64x128xf32>
    %92 = vector.shape_cast %91 : vector<64x128xf32> to vector<8x8x128xf32>
    %cst_25 = arith.constant dense<0.000000e+00> : vector<8x128xf32>
    %93 = vector.multi_reduction <add>, %92, %cst_25 [0] : vector<8x8x128xf32> to vector<8x128xf32>
    %cst_26 = arith.constant dense<0.000000e+00> : vector<8x128xf32>
    %94 = tpu.matmul %93, %15, %cst_26 {dimension_numbers = #tpu.dot_dimension_numbers<[1], [0], [0], [1], [0, 0, 1, 1], [], []>} : vector<8x128xf32>, vector<128x128xf32>, vector<8x128xf32> -> vector<8x128xf32>
    %95 = arith.addf %11, %94 : vector<8x128xf32>
    %96 = math.tanh %95 : vector<8x128xf32>
    %97 = vector.shape_cast %71 : vector<8x128xf32> to vector<1x8x128xf32>
    %98 = vector.shape_cast %97 : vector<1x8x128xf32> to vector<1x8x128xf32>
    %99 = vector.broadcast %98 : vector<1x8x128xf32> to vector<8x8x128xf32>
    %100 = vector.shape_cast %99 : vector<8x8x128xf32> to vector<64x128xf32>
    %101 = arith.subf %100, %66 : vector<64x128xf32>
    %cst_27 = arith.constant 1.000000e+00 : f32
    %102 = vector.broadcast %cst_27 : f32 to vector<64x128xf32>
    %103 = arith.subf %102, %84 : vector<64x128xf32>
    %104 = arith.mulf %103, %101 : vector<64x128xf32>
    %105 = vector.shape_cast %96 : vector<8x128xf32> to vector<1x8x128xf32>
    %106 = vector.shape_cast %105 : vector<1x8x128xf32> to vector<1x8x128xf32>
    %107 = vector.broadcast %106 : vector<1x8x128xf32> to vector<8x8x128xf32>
    %108 = vector.shape_cast %107 : vector<8x8x128xf32> to vector<64x128xf32>
    %109 = arith.mulf %84, %108 : vector<64x128xf32>
    %110 = arith.addf %104, %109 : vector<64x128xf32>
    %111 = arith.mulf %110, %3 : vector<64x128xf32>
    %cst_28 = arith.constant dense<0.000000e+00> : vector<64x256xf32>
    %112 = tpu.matmul %111, %14, %cst_28 {dimension_numbers = #tpu.dot_dimension_numbers<[1], [0], [0], [1], [0, 0, 1, 1], [], []>} : vector<64x128xf32>, vector<128x256xf32>, vector<64x256xf32> -> vector<64x256xf32>
    %113 = vector.extract_strided_slice %112 {offsets = [0, 0], sizes = [64, 128], strides = [1, 1]} : vector<64x256xf32> to vector<64x128xf32>
    %114 = vector.extract_strided_slice %112 {offsets = [0, 128], sizes = [64, 128], strides = [1, 1]} : vector<64x256xf32> to vector<64x128xf32>
    %115 = vector.shape_cast %111 : vector<64x128xf32> to vector<8x8x128xf32>
    %cst_29 = arith.constant dense<0.000000e+00> : vector<8x128xf32>
    %116 = vector.multi_reduction <add>, %115, %cst_29 [1] : vector<8x8x128xf32> to vector<8x128xf32>
    %117 = vector.shape_cast %113 : vector<64x128xf32> to vector<8x8x128xf32>
    %cst_30 = arith.constant dense<0.000000e+00> : vector<8x128xf32>
    %118 = vector.multi_reduction <add>, %117, %cst_30 [1] : vector<8x8x128xf32> to vector<8x128xf32>
    %119 = arith.addf %9, %118 : vector<8x128xf32>
    %120 = vector.shape_cast %119 : vector<8x128xf32> to vector<1x8x128xf32>
    %121 = vector.shape_cast %120 : vector<1x8x128xf32> to vector<1x8x128xf32>
    %122 = vector.broadcast %121 : vector<1x8x128xf32> to vector<8x8x128xf32>
    %123 = vector.shape_cast %122 : vector<8x8x128xf32> to vector<64x128xf32>
    %124 = arith.subf %123, %113 : vector<64x128xf32>
    %125 = arith.negf %124 : vector<64x128xf32>
    %126 = math.exp %125 : vector<64x128xf32>
    %cst_31 = arith.constant 1.000000e+00 : f32
    %127 = vector.broadcast %cst_31 : f32 to vector<64x128xf32>
    %128 = arith.addf %127, %126 : vector<64x128xf32>
    %129 = arith.divf %127, %128 : vector<64x128xf32>
    %130 = arith.addf %20, %114 : vector<64x128xf32>
    %131 = arith.negf %130 : vector<64x128xf32>
    %132 = math.exp %131 : vector<64x128xf32>
    %cst_32 = arith.constant 1.000000e+00 : f32
    %133 = vector.broadcast %cst_32 : f32 to vector<64x128xf32>
    %134 = arith.addf %133, %132 : vector<64x128xf32>
    %135 = arith.divf %133, %134 : vector<64x128xf32>
    %136 = arith.mulf %135, %111 : vector<64x128xf32>
    %137 = vector.shape_cast %136 : vector<64x128xf32> to vector<8x8x128xf32>
    %cst_33 = arith.constant dense<0.000000e+00> : vector<8x128xf32>
    %138 = vector.multi_reduction <add>, %137, %cst_33 [0] : vector<8x8x128xf32> to vector<8x128xf32>
    %cst_34 = arith.constant dense<0.000000e+00> : vector<8x128xf32>
    %139 = tpu.matmul %138, %15, %cst_34 {dimension_numbers = #tpu.dot_dimension_numbers<[1], [0], [0], [1], [0, 0, 1, 1], [], []>} : vector<8x128xf32>, vector<128x128xf32>, vector<8x128xf32> -> vector<8x128xf32>
    %140 = arith.addf %11, %139 : vector<8x128xf32>
    %141 = math.tanh %140 : vector<8x128xf32>
    %142 = vector.shape_cast %116 : vector<8x128xf32> to vector<1x8x128xf32>
    %143 = vector.shape_cast %142 : vector<1x8x128xf32> to vector<1x8x128xf32>
    %144 = vector.broadcast %143 : vector<1x8x128xf32> to vector<8x8x128xf32>
    %145 = vector.shape_cast %144 : vector<8x8x128xf32> to vector<64x128xf32>
    %146 = arith.subf %145, %111 : vector<64x128xf32>
    %cst_35 = arith.constant 1.000000e+00 : f32
    %147 = vector.broadcast %cst_35 : f32 to vector<64x128xf32>
    %148 = arith.subf %147, %129 : vector<64x128xf32>
    %149 = arith.mulf %148, %146 : vector<64x128xf32>
    %150 = vector.shape_cast %141 : vector<8x128xf32> to vector<1x8x128xf32>
    %151 = vector.shape_cast %150 : vector<1x8x128xf32> to vector<1x8x128xf32>
    %152 = vector.broadcast %151 : vector<1x8x128xf32> to vector<8x8x128xf32>
    %153 = vector.shape_cast %152 : vector<8x8x128xf32> to vector<64x128xf32>
    %154 = arith.mulf %129, %153 : vector<64x128xf32>
    %155 = arith.addf %149, %154 : vector<64x128xf32>
    %156 = arith.mulf %155, %3 : vector<64x128xf32>
    %157 = vector.shape_cast %156 : vector<64x128xf32> to vector<1x64x128xf32>
    %c0_36 = arith.constant 0 : index
    %c0_37 = arith.constant 0 : index
    %c0_38 = arith.constant 0 : index
    %158 = vector.load %arg7[%c0_36, %c0_37, %c0_38] : memref<1x64x128xf32, #tpu.memory_space<vmem>>, vector<1x64x128xf32>
    tpu.vector_store %arg7[%c0_36, %c0_37, %c0_38], %157 {strides = array<i32>} : memref<1x64x128xf32, #tpu.memory_space<vmem>>, vector<1x64x128xf32>,
    %159 = vector.shape_cast %156 : vector<64x128xf32> to vector<8x8x128xf32>
    %cst_39 = arith.constant dense<0.000000e+00> : vector<8x128xf32>
    %160 = vector.multi_reduction <add>, %159, %cst_39 [1] : vector<8x8x128xf32> to vector<8x128xf32>
    %cst_40 = arith.constant dense<0.000000e+00> : vector<8x128xf32>
    %161 = vector.multi_reduction <add>, %159, %cst_40 [0] : vector<8x8x128xf32> to vector<8x128xf32>
    %162 = arith.addf %160, %161 : vector<8x128xf32>
    %cst_41 = arith.constant dense<0.000000e+00> : vector<8x128xf32>
    %163 = tpu.matmul %162, %16, %cst_41 {dimension_numbers = #tpu.dot_dimension_numbers<[1], [0], [0], [1], [0, 0, 1, 1], [], []>} : vector<8x128xf32>, vector<128x128xf32>, vector<8x128xf32> -> vector<8x128xf32>
    %164 = arith.addf %12, %163 : vector<8x128xf32>
    %cst_42 = arith.constant 0.000000e+00 : f32
    %165 = vector.broadcast %cst_42 : f32 to vector<8x128xf32>
    %166 = arith.maximumf %164, %165 : vector<8x128xf32>
    %167 = vector.shape_cast %166 : vector<8x128xf32> to vector<1x8x128xf32>
    %c0_43 = arith.constant 0 : index
    %c0_44 = arith.constant 0 : index
    %c0_45 = arith.constant 0 : index
    %168 = vector.load %arg6[%c0_43, %c0_44, %c0_45] : memref<1x8x128xf32, #tpu.memory_space<vmem>>, vector<1x8x128xf32>
    tpu.vector_store %arg6[%c0_43, %c0_44, %c0_45], %167 {strides = array<i32>} : memref<1x8x128xf32, #tpu.memory_space<vmem>>, vector<1x8x128xf32>,
    return
  }
  func.func @transform_0(%arg0: i32) -> (i32, i32, i32) {
    %c0_i32 = arith.constant 0 : i32
    %c0_i32_0 = arith.constant 0 : i32
    %c0_i32_1 = arith.constant 0 : i32
    return %arg0, %c0_i32, %c0_i32_0 : i32, i32, i32
  }
  func.func @transform_1(%arg0: i32) -> (i32, i32, i32) {
    %c0_i32 = arith.constant 0 : i32
    %c0_i32_0 = arith.constant 0 : i32
    %c0_i32_1 = arith.constant 0 : i32
    return %arg0, %c0_i32, %c0_i32_0 : i32, i32, i32
  }
  func.func @transform_2(%arg0: i32) -> (i32, i32) {
    %c0_i32 = arith.constant 0 : i32
    %c0_i32_0 = arith.constant 0 : i32
    %c0_i32_1 = arith.constant 0 : i32
    return %c0_i32, %c0_i32_0 : i32, i32
  }
  func.func @transform_3(%arg0: i32) -> (i32, i32) {
    %c0_i32 = arith.constant 0 : i32
    %c0_i32_0 = arith.constant 0 : i32
    %c0_i32_1 = arith.constant 0 : i32
    return %c0_i32, %c0_i32_0 : i32, i32
  }
  func.func @transform_4(%arg0: i32) -> (i32, i32) {
    %c0_i32 = arith.constant 0 : i32
    %c0_i32_0 = arith.constant 0 : i32
    %c0_i32_1 = arith.constant 0 : i32
    return %c0_i32, %c0_i32_0 : i32, i32
  }
  func.func @transform_5(%arg0: i32) -> (i32, i32, i32) {
    %c0_i32 = arith.constant 0 : i32
    %c0_i32_0 = arith.constant 0 : i32
    %c0_i32_1 = arith.constant 0 : i32
    return %arg0, %c0_i32, %c0_i32_0 : i32, i32, i32
  }
  func.func @transform_6(%arg0: i32) -> (i32, i32, i32) {
    %c0_i32 = arith.constant 0 : i32
    %c0_i32_0 = arith.constant 0 : i32
    %c0_i32_1 = arith.constant 0 : i32
    return %arg0, %c0_i32, %c0_i32_0 : i32, i32, i32
  }
}

</mosaic_0001>

<llo_original>
// kernel: tpu_custom_call.1
$region0: #{tpu_custom_call.1}
  #allocation0 [shape = 'u32[]', space=smem, size = 0x4, offset = 0x4, fixed_abs, tag = 'smem constant byte address 0x4 - core index']
  #allocation1 [shape = 'u32[144,128]{1,0:T(1,128)}', space=vmem, size = 0x12000, scoped, tag = 'internal scratch']
  %s0 = inlined_call_operand.hbm [shape: f32[2,8,32], index: 0, kind: input, shape index: {}]
  %s1 = inlined_call_operand.hbm [shape: f32[2,64,128], index: 1, kind: input, shape index: {}]
  %s2 = inlined_call_operand.hbm [shape: f32[32,512], index: 2, kind: input, shape index: {}]
  %s3 = inlined_call_operand.vmem [shape: f32[1,512], index: 3, kind: input, shape index: {}]
  %s4 = inlined_call_operand.hbm [shape: f32[128,512], index: 4, kind: input, shape index: {}]
  %s5 = inlined_call_operand.hbm [shape: f32[2,8,128], index: 5, kind: output, shape index: {0}]
  %s6 = inlined_call_operand.hbm [shape: f32[2,64,128], index: 6, kind: output, shape index: {1}]
  %7 = xla_tuple %s5, %s6
  %s8 = sld [smem:[#allocation0]]
  $region77: #{tpu_custom_call.1} parent=0
    _
  %s10 = ssub.s32 1, %s8
  %s11 = scalar_select 0, %s10, %s8
  $region1: #{tpu_custom_call.1} parent=0
    #allocation2 [shape = 'u8[8192]{0}', space=vmem, size = 0x2000, scoped, tag = 'input window, operand 0']
    #allocation3 [shape = 's32[2]{0}', space=sflag, size = 0x8, scoped, tag = 'scoped memory for tpu_custom_call.1']
    #allocation4 [shape = 's32[2]{0}', space=sflag, size = 0x8, scoped, tag = 'scoped memory for tpu_custom_call.1']
    #allocation5 [shape = 'u8[65536]{0}', space=vmem, size = 0x10000, scoped, tag = 'input window, operand 1']
    #allocation6 [shape = 's32[2]{0}', space=sflag, size = 0x8, scoped, tag = 'scoped memory for tpu_custom_call.1']
    #allocation7 [shape = 'u8[65536]{0}', space=vmem, size = 0x10000, scoped, tag = 'input window, operand 2, single buffered']
    #allocation8 [shape = 'u8[262144]{0}', space=vmem, size = 0x40000, scoped, tag = 'input window, operand 4, single buffered']
    #allocation9 [shape = 's32[1]{0}', space=sflag, size = 0x4, scoped, tag = 'scoped memory for tpu_custom_call.1']
    #allocation10 [shape = 'u8[8192]{0}', space=vmem, size = 0x2000, scoped, tag = 'output window, operand 0']
    #allocation11 [shape = 'u8[65536]{0}', space=vmem, size = 0x10000, scoped, tag = 'output window, operand 1']
    #allocation12 [shape = 's32[2]{0}', space=sflag, size = 0x8, scoped, tag = 'scoped memory for tpu_custom_call.1']
    %12 = vsyncpa [#allocation3], 0
    %s13 = scalar_lea.sflag [#allocation3], 1
    %14 = vsyncpa %s13, 0
    %15 = vsyncpa [#allocation6], 0
    %s16 = scalar_lea.sflag [#allocation6], 1
    %17 = vsyncpa %s16, 0
    %18 = vsyncpa [#allocation9], 0
    %19 = vsyncpa [#allocation4], 0
    %s20 = scalar_lea.sflag [#allocation4], 1
    %21 = vsyncpa %s20, 0
    %22 = vsyncpa [#allocation12], 0
    %s23 = scalar_lea.sflag [#allocation12], 1
    %24 = vsyncpa %s23, 0
    loop: start=0, step=1, limit=4
    $region2: #{tpu_custom_call.1} parent=1 // loop_pre_header
      _
    $region3: #{tpu_custom_call.1} parent=1 // loop_header
      %s26 = sphi 0, %s30
      %p27 = scmp.ge.s32.totalorder %s26, 4
      %s36 = sphi 0, %s38
      %s39 = sphi 0, %s36
      %s40 = sphi 0, %s39
      %s56 = sphi 0, %s40
      %s62 = sphi 0, %s64
      %s65 = sphi 0, %s62
      %s66 = sphi 0, %s65
      %s82 = sphi 0, %s66
      %s86 = sphi 0, %s86
      %s88 = sphi 0, %s86
      %s89 = sphi 0, %s88
      %s103 = sphi 0, %s89
      %s107 = sphi 0, %s107
      %s109 = sphi 0, %s107
      %s110 = sphi 0, %s109
      %s124 = sphi 0, %s110
      %s128 = sphi 0, %s128
      %s130 = sphi 0, %s128
      %s131 = sphi 0, %s130
      %s145 = sphi 0, %s131
      %s151 = sphi 0, %s153
      %s154 = sphi 0, %s151
      %s155 = sphi 0, %s154
      %s171 = sphi 0, %s155
      %s177 = sphi 0, %s179
      %s180 = sphi 0, %s177
      %s181 = sphi 0, %s180
      %s197 = sphi 0, %s181
    $region4: #{tpu_custom_call.1} parent=1 // loop_header_branch
      %29 = sbr.rel (%p27) target = $region8
    $region5: #{tpu_custom_call.1} parent=1 // loop_body
      %s31 = ssub.s32 %s26, 1
      %s32 = ssub.s32 %s26, 2
      %s33 = sadd.s32 %s26, 1
      %s34 = ssub.s32 %s26, %s33
      %p35 = scmp.eq.s32.totalorder %s34, 0
      %s37 = sadd.s32 %s36, 1
      %s38 = scalar_select %p35, %s36, %s37
      %p41 = pneg %p35
      %p42 = scmp.eq.s32.totalorder %s26, 1
      %p43 = por %p41, %p42
      %p44 = scmp.ne.s32.totalorder %s36, %s39
      %p45 = scmp.eq.s32.totalorder %s26, 0
      %p46 = por %p44, %p45
      %p47 = scmp.ne.s32.totalorder %s36, %s39
      %p48 = scmp.eq.s32.totalorder %s31, 1
      %p49 = por %p47, %p48
      %p50 = scmp.ne.s32.totalorder %s39, %s40
      %p51 = scmp.eq.s32.totalorder %s31, 0
      %p52 = por %p50, %p51
      %p53 = scmp.ne.s32.totalorder %s39, %s40
      %p54 = scmp.eq.s32.totalorder %s32, 1
      %p55 = por %p53, %p54
      %p57 = scmp.ne.s32.totalorder %s40, %s56
      %p58 = scmp.eq.s32.totalorder %s32, 0
      %p59 = por %p57, %p58
      %s60 = ssub.s32 %s26, %s33
      %p61 = scmp.eq.s32.totalorder %s60, 0
      %s63 = sadd.s32 %s62, 1
      %s64 = scalar_select %p61, %s62, %s63
      %p67 = pneg %p61
      %p68 = scmp.eq.s32.totalorder %s26, 1
      %p69 = por %p67, %p68
      %p70 = scmp.ne.s32.totalorder %s62, %s65
      %p71 = scmp.eq.s32.totalorder %s26, 0
      %p72 = por %p70, %p71
      %p73 = scmp.ne.s32.totalorder %s62, %s65
      %p74 = scmp.eq.s32.totalorder %s31, 1
      %p75 = por %p73, %p74
      %p76 = scmp.ne.s32.totalorder %s65, %s66
      %p77 = scmp.eq.s32.totalorder %s31, 0
      %p78 = por %p76, %p77
      %p79 = scmp.ne.s32.totalorder %s65, %s66
      %p80 = scmp.eq.s32.totalorder %s32, 1
      %p81 = por %p79, %p80
      %p83 = scmp.ne.s32.totalorder %s66, %s82
      %p84 = scmp.eq.s32.totalorder %s32, 0
      %p85 = por %p83, %p84
      %s87 = sadd.s32 %s86, 1
      %p90 = scmp.eq.s32.totalorder %s26, 1
      %p91 = scmp.ne.s32.totalorder %s86, %s88
      %p92 = scmp.eq.s32.totalorder %s26, 0
      %p93 = por %p91, %p92
      %p94 = scmp.ne.s32.totalorder %s86, %s88
      %p95 = scmp.eq.s32.totalorder %s31, 1
      %p96 = por %p94, %p95
      %p97 = scmp.ne.s32.totalorder %s88, %s89
      %p98 = scmp.eq.s32.totalorder %s31, 0
      %p99 = por %p97, %p98
      %p100 = scmp.ne.s32.totalorder %s88, %s89
      %p101 = scmp.eq.s32.totalorder %s32, 1
      %p102 = por %p100, %p101
      %p104 = scmp.ne.s32.totalorder %s89, %s103
      %p105 = scmp.eq.s32.totalorder %s32, 0
      %p106 = por %p104, %p105
      %s108 = sadd.s32 %s107, 1
      %p111 = scmp.eq.s32.totalorder %s26, 1
      %p112 = scmp.ne.s32.totalorder %s107, %s109
      %p113 = scmp.eq.s32.totalorder %s26, 0
      %p114 = por %p112, %p113
      %p115 = scmp.ne.s32.totalorder %s107, %s109
      %p116 = scmp.eq.s32.totalorder %s31, 1
      %p117 = por %p115, %p116
      %p118 = scmp.ne.s32.totalorder %s109, %s110
      %p119 = scmp.eq.s32.totalorder %s31, 0
      %p120 = por %p118, %p119
      %p121 = scmp.ne.s32.totalorder %s109, %s110
      %p122 = scmp.eq.s32.totalorder %s32, 1
      %p123 = por %p121, %p122
      %p125 = scmp.ne.s32.totalorder %s110, %s124
      %p126 = scmp.eq.s32.totalorder %s32, 0
      %p127 = por %p125, %p126
      %s129 = sadd.s32 %s128, 1
      %p132 = scmp.eq.s32.totalorder %s26, 1
      %p133 = scmp.ne.s32.totalorder %s128, %s130
      %p134 = scmp.eq.s32.totalorder %s26, 0
      %p135 = por %p133, %p134
      %p136 = scmp.ne.s32.totalorder %s128, %s130
      %p137 = scmp.eq.s32.totalorder %s31, 1
      %p138 = por %p136, %p137
      %p139 = scmp.ne.s32.totalorder %s130, %s131
      %p140 = scmp.eq.s32.totalorder %s31, 0
      %p141 = por %p139, %p140
      %p142 = scmp.ne.s32.totalorder %s130, %s131
      %p143 = scmp.eq.s32.totalorder %s32, 1
      %p144 = por %p142, %p143
      %p146 = scmp.ne.s32.totalorder %s131, %s145
      %p147 = scmp.eq.s32.totalorder %s32, 0
      %p148 = por %p146, %p147
      %s149 = ssub.s32 %s26, %s33
      %p150 = scmp.eq.s32.totalorder %s149, 0
      %s152 = sadd.s32 %s151, 1
      %s153 = scalar_select %p150, %s151, %s152
      %p156 = pneg %p150
      %p157 = scmp.eq.s32.totalorder %s26, 1
      %p158 = por %p156, %p157
      %p159 = scmp.ne.s32.totalorder %s151, %s154
      %p160 = scmp.eq.s32.totalorder %s26, 0
      %p161 = por %p159, %p160
      %p162 = scmp.ne.s32.totalorder %s151, %s154
      %p163 = scmp.eq.s32.totalorder %s31, 1
      %p164 = por %p162, %p163
      %p165 = scmp.ne.s32.totalorder %s154, %s155
      %p166 = scmp.eq.s32.totalorder %s31, 0
      %p167 = por %p165, %p166
      %p168 = scmp.ne.s32.totalorder %s154, %s155
      %p169 = scmp.eq.s32.totalorder %s32, 1
      %p170 = por %p168, %p169
      %p172 = scmp.ne.s32.totalorder %s155, %s171
      %p173 = scmp.eq.s32.totalorder %s32, 0
      %p174 = por %p172, %p173
      %s175 = ssub.s32 %s26, %s33
      %p176 = scmp.eq.s32.totalorder %s175, 0
      %s178 = sadd.s32 %s177, 1
      %s179 = scalar_select %p176, %s177, %s178
      %p182 = pneg %p176
      %p183 = scmp.eq.s32.totalorder %s26, 1
      %p184 = por %p182, %p183
      %p185 = scmp.ne.s32.totalorder %s177, %s180
      %p186 = scmp.eq.s32.totalorder %s26, 0
      %p187 = por %p185, %p186
      %p188 = scmp.ne.s32.totalorder %s177, %s180
      %p189 = scmp.eq.s32.totalorder %s31, 1
      %p190 = por %p188, %p189
      %p191 = scmp.ne.s32.totalorder %s180, %s181
      %p192 = scmp.eq.s32.totalorder %s31, 0
      %p193 = por %p191, %p192
      %p194 = scmp.ne.s32.totalorder %s180, %s181
      %p195 = scmp.eq.s32.totalorder %s32, 1
      %p196 = por %p194, %p195
      %p198 = scmp.ne.s32.totalorder %s181, %s197
      %p199 = scmp.eq.s32.totalorder %s32, 0
      %p200 = por %p198, %p199
      %p201 = scmp.le.s32.totalorder 1, %s26
      %p202 = scmp.lt.s32.totalorder %s26, 3
      %p203 = pnand %p201, %p202
      %p204 = pneg %p203
      // Predicated region
      $region9: #{tpu_custom_call.1} parent=5 // pred_check
        _
      $region10: #{tpu_custom_call.1} parent=5 // pred_check_branch
        %206 = sbr.rel (%p203) target = $region12
      $region11: #{tpu_custom_call.1} parent=5 // pred_region
        %s207 = ssub.s32 %s26, 1
        // Predicated region
        $region13: #{tpu_custom_call.1} parent=11 // pred_check
          %p208 = pneg %p99
        $region14: #{tpu_custom_call.1} parent=11 // pred_check_branch
          %210 = sbr.rel (%p208) target = $region16
        $region15: #{tpu_custom_call.1} parent=11 // pred_region
          %s212 = ssub.s32 2048, 2048
          %213 = vsyncadd [#allocation6], %s212
          %s214 = sshll.u32 [#allocation7], 4
          %s215 = int_to_ptr.vmem [resolvable:$true] %s214
          %220 = dma.hbm_to_vmem [thread:$0]  %s2, 2048, %s215, [#allocation6], 512, 512, 32
        $region16: #{tpu_custom_call.1} parent=11 // pred_fallthru
          _
        // Predicated region
        $region17: #{tpu_custom_call.1} parent=11 // pred_check
          %p221 = pneg %p120
        $region18: #{tpu_custom_call.1} parent=11 // pred_check_branch
          %223 = sbr.rel (%p221) target = $region20
        $region19: #{tpu_custom_call.1} parent=11 // pred_region
          _
        $region20: #{tpu_custom_call.1} parent=11 // pred_fallthru
          _
        // Predicated region
        $region21: #{tpu_custom_call.1} parent=11 // pred_check
          %p224 = pneg %p141
        $region22: #{tpu_custom_call.1} parent=11 // pred_check_branch
          %226 = sbr.rel (%p224) target = $region24
        $region23: #{tpu_custom_call.1} parent=11 // pred_region
          %s228 = ssub.s32 8192, 8192
          %229 = vsyncadd [#allocation9], %s228
          %s230 = sshll.u32 [#allocation8], 4
          %s231 = int_to_ptr.vmem [resolvable:$true] %s230
          %236 = dma.hbm_to_vmem [thread:$0]  %s4, 8192, %s231, [#allocation9], 512, 512, 32
        $region24: #{tpu_custom_call.1} parent=11 // pred_fallthru
          _
      $region12: #{tpu_custom_call.1} parent=5 // pred_fallthru
        _
      %p237 = scmp.lt.s32.totalorder %s26, 2
      // Predicated region
      $region25: #{tpu_custom_call.1} parent=5 // pred_check
        %p238 = pneg %p237
      $region26: #{tpu_custom_call.1} parent=5 // pred_check_branch
        %240 = sbr.rel (%p238) target = $region28
      $region27: #{tpu_custom_call.1} parent=5 // pred_region
        // Predicated region
        $region29: #{tpu_custom_call.1} parent=27 // pred_check
          %p241 = pneg %p46
        $region30: #{tpu_custom_call.1} parent=27 // pred_check_branch
          %243 = sbr.rel (%p241) target = $region32
        $region31: #{tpu_custom_call.1} parent=27 // pred_region
          %s244 = sand.u32 %s36, 1
          %s245 = scalar_lea.sflag [#allocation3], %s244
          %s246 = sand.u32 %s36, 1
          %s247 = smul.addr %s246, 8
          %s248 = scalar_lea.vmem [#allocation2], %s247
          %s250 = ssub.s32 128, 128
          %251 = vsyncadd %s245, %s250
          %s252 = smul.addr %s26, 128
          %s253 = scalar_lea.hbm %s0, %s252
          %s255 = sshll.u32 %s248, 4
          %s256 = int_to_ptr.vmem [resolvable:$true] %s255
          %258 = dma.hbm_to_vmem [thread:$0]  %s253, 128, %s256, %s245
        $region32: #{tpu_custom_call.1} parent=27 // pred_fallthru
          _
        // Predicated region
        $region33: #{tpu_custom_call.1} parent=27 // pred_check
          %p259 = pneg %p72
        $region34: #{tpu_custom_call.1} parent=27 // pred_check_branch
          %261 = sbr.rel (%p259) target = $region36
        $region35: #{tpu_custom_call.1} parent=27 // pred_region
          %s262 = sand.u32 %s26, 1
          %s263 = scalar_lea.sflag [#allocation6], %s262
          %s264 = sand.u32 %s62, 1
          %s265 = smul.addr %s264, 64
          %s266 = scalar_lea.vmem [#allocation5], %s265
          %s268 = ssub.s32 1024, 1024
          %269 = vsyncadd %s263, %s268
          %s270 = smul.addr %s26, 8
          %s271 = smul.addr %s270, 128
          %s272 = scalar_lea.hbm %s1, %s271
          %s273 = sshll.u32 %s266, 4
          %s274 = int_to_ptr.vmem [resolvable:$true] %s273
          %279 = dma.hbm_to_vmem [thread:$0]  %s272, 1024, %s274, %s263, 128, 128, 8
        $region36: #{tpu_custom_call.1} parent=27 // pred_fallthru
          _
      $region28: #{tpu_custom_call.1} parent=5 // pred_fallthru
        _
      %p280 = scmp.le.s32.totalorder 1, %s26
      %p281 = scmp.lt.s32.totalorder %s26, 3
      %p282 = pnand %p280, %p281
      %p283 = pneg %p282
      // Predicated region
      $region37: #{tpu_custom_call.1} parent=5 // pred_check
        _
      $region38: #{tpu_custom_call.1} parent=5 // pred_check_branch
        %285 = sbr.rel (%p282) target = $region40
      $region39: #{tpu_custom_call.1} parent=5 // pred_region
        %s286 = ssub.s32 %s26, 1
        %s287 = sand.u32 %s39, 1
        %s288 = scalar_lea.sflag [#allocation3], %s287
        %s289 = sand.u32 %s39, 1
        %s290 = smul.addr %s289, 8
        %s291 = scalar_lea.vmem [#allocation2], %s290
        // Predicated region
        $region41: #{tpu_custom_call.1} parent=39 // pred_check
          %p292 = pneg %p52
        $region42: #{tpu_custom_call.1} parent=39 // pred_check_branch
          %294 = sbr.rel (%p292) target = $region44
        $region43: #{tpu_custom_call.1} parent=39 // pred_region
          %295 = dma.done %s288, 128
        $region44: #{tpu_custom_call.1} parent=39 // pred_fallthru
          _
        %s296 = sand.u32 %s31, 1
        %s297 = scalar_lea.sflag [#allocation6], %s296
        %s298 = sand.u32 %s65, 1
        %s299 = smul.addr %s298, 64
        %s300 = scalar_lea.vmem [#allocation5], %s299
        // Predicated region
        $region45: #{tpu_custom_call.1} parent=39 // pred_check
          %p301 = pneg %p78
        $region46: #{tpu_custom_call.1} parent=39 // pred_check_branch
          %303 = sbr.rel (%p301) target = $region48
        $region47: #{tpu_custom_call.1} parent=39 // pred_region
          %304 = dma.done %s297, 1024
        $region48: #{tpu_custom_call.1} parent=39 // pred_fallthru
          _
        // Predicated region
        $region49: #{tpu_custom_call.1} parent=39 // pred_check
          %p305 = pneg %p99
        $region50: #{tpu_custom_call.1} parent=39 // pred_check_branch
          %307 = sbr.rel (%p305) target = $region52
        $region51: #{tpu_custom_call.1} parent=39 // pred_region
          %308 = dma.done [#allocation6], 2048
        $region52: #{tpu_custom_call.1} parent=39 // pred_fallthru
          _
        // Predicated region
        $region53: #{tpu_custom_call.1} parent=39 // pred_check
          %p309 = pneg %p141
        $region54: #{tpu_custom_call.1} parent=39 // pred_check_branch
          %311 = sbr.rel (%p309) target = $region56
        $region55: #{tpu_custom_call.1} parent=39 // pred_region
          %312 = dma.done [#allocation9], 8192
        $region56: #{tpu_custom_call.1} parent=39 // pred_fallthru
          _
        %s313 = sand.u32 %s39, 1
        %s314 = scalar_lea.sflag [#allocation3], %s313
        %s315 = sand.u32 %s39, 1
        %s316 = smul.addr %s315, 8
        %s317 = scalar_lea.vmem [#allocation2], %s316
        %p318 = pneg %p52
        %p319 = pneg %p49
        %s320 = sand.u32 %s31, 1
        %s321 = scalar_lea.sflag [#allocation6], %s320
        %s322 = sand.u32 %s65, 1
        %s323 = smul.addr %s322, 64
        %s324 = scalar_lea.vmem [#allocation5], %s323
        %p325 = pneg %p78
        %p326 = pneg %p75
        %p327 = pneg %p99
        %p328 = pneg %p96
        %p329 = pneg %p120
        %p330 = pneg %p117
        %p331 = pneg %p141
        %p332 = pneg %p138
        %p333 = pneg %p167
        %p334 = pneg %p164
        %s335 = sand.u32 %s154, 1
        %s336 = scalar_lea.sflag [#allocation4], %s335
        %s337 = sand.u32 %s154, 1
        %s338 = smul.addr %s337, 8
        %s339 = scalar_lea.vmem [#allocation10], %s338
        %p340 = pneg %p193
        %p341 = pneg %p190
        %s342 = sand.u32 %s180, 1
        %s343 = scalar_lea.sflag [#allocation12], %s342
        %s344 = sand.u32 %s180, 1
        %s345 = smul.addr %s344, 64
        %s346 = scalar_lea.vmem [#allocation11], %s345
        %v347 = vld [vmem:[%s291] sm:$0xff]
        %v348 = vld [vmem:[%s300] sm:$0xff]
        %v349 = vld [vmem:[%s300 + $0x8] sm:$0xff]
        %v350 = vld [vmem:[%s300 + $0x10] sm:$0xff]
        %v351 = vld [vmem:[%s300 + $0x18] sm:$0xff]
        %v352 = vld [vmem:[%s300 + $0x20] sm:$0xff]
        %v353 = vld [vmem:[%s300 + $0x28] sm:$0xff]
        %v354 = vld [vmem:[%s300 + $0x30] sm:$0xff]
        %v355 = vld [vmem:[%s300 + $0x38] sm:$0xff]
        %v356 = vld [vmem:[#allocation7] sm:$0xff]
        %v357 = vld [vmem:[#allocation7 + $0x8] sm:$0xff]
        %v358 = vld [vmem:[#allocation7 + $0x10] sm:$0xff]
        %v359 = vld [vmem:[#allocation7 + $0x18] sm:$0xff]
        %v360 = vld [vmem:[#allocation7 + $0x20] sm:$0xff]
        %v361 = vld [vmem:[#allocation7 + $0x28] sm:$0xff]
        %v362 = vld [vmem:[#allocation7 + $0x30] sm:$0xff]
        %v363 = vld [vmem:[#allocation7 + $0x38] sm:$0xff]
        %v364 = vld [vmem:[#allocation7 + $0x40] sm:$0xff]
        %v365 = vld [vmem:[#allocation7 + $0x48] sm:$0xff]
        %v366 = vld [vmem:[#allocation7 + $0x50] sm:$0xff]
        %v367 = vld [vmem:[#allocation7 + $0x58] sm:$0xff]
        %v368 = vld [vmem:[#allocation7 + $0x60] sm:$0xff]
        %v369 = vld [vmem:[#allocation7 + $0x68] sm:$0xff]
        %v370 = vld [vmem:[#allocation7 + $0x70] sm:$0xff]
        %v371 = vld [vmem:[#allocation7 + $0x78] sm:$0xff]
        %v372 = vld [vmem:[%s3] sm:$0xf]
        %v374 = vlaneseq
        %v375 = vshrl.u32 %v374, 7
        %v376 = vsub.s32 0, %v375
        %v377 = vrot.slane %v372, %v376
        %v378 = vlaneseq
        %v379 = vshrl.u32 %v378, 7
        %v380 = vsub.s32 1, %v379
        %v381 = vrot.slane %v372, %v380
        %v382 = vlaneseq
        %v383 = vshrl.u32 %v382, 7
        %v384 = vsub.s32 2, %v383
        %v385 = vrot.slane %v372, %v384
        %v386 = vlaneseq
        %v387 = vshrl.u32 %v386, 7
        %v388 = vsub.s32 3, %v387
        %v389 = vrot.slane %v372, %v388
        %vm394 = vcmask 261120
        %v396 = vsel %vm394, %v347, 0
        %398 = vmatprep.subr.mxu0 %v357
        %399 = vmatpush1.msra.mxu0 %v356
        %400 = vmatprep.subr.mxu0 %v361
        %401 = vmatpush1.msra.mxu0 %v360
        %402 = vmatprep.subr.mxu0 %v365
        %403 = vmatpush1.msra.mxu0 %v364
        %404 = vmatprep.subr.mxu0 %v369
        %405 = vmatpush1.msra.mxu0 %v368
        %406 = vmatprep.subr.mxu0 0.0
        %407 = vmatpush1.msra.mxu0 0.0
        %408 = vmatprep.subr.mxu0 0.0
        %409 = vmatpush1.msra.mxu0 0.0
        %410 = vmatprep.subr.mxu0 0.0
        %411 = vmatpush1.msra.mxu0 0.0
        %412 = vmatprep.subr.mxu0 0.0
        %413 = vmatpush1.msra.mxu0 0.0
        %414 = vmatprep.subr.mxu0 0.0
        %415 = vmatpush1.msra.mxu0 0.0
        %416 = vmatprep.subr.mxu0 0.0
        %417 = vmatpush1.msra.mxu0 0.0
        %418 = vmatprep.subr.mxu0 0.0
        %419 = vmatpush1.msra.mxu0 0.0
        %420 = vmatprep.subr.mxu0 0.0
        %421 = vmatpush1.msra.mxu0 0.0
        %422 = vmatprep.subr.mxu0 0.0
        %423 = vmatpush1.msra.mxu0 0.0
        %424 = vmatprep.subr.mxu0 0.0
        %425 = vmatpush1.msra.mxu0 0.0
        %426 = vmatprep.subr.mxu0 0.0
        %427 = vmatpush1.msra.mxu0 0.0
        %428 = vmatprep.subr.mxu0 0.0
        %429 = vmatpush1.msra.mxu0 0.0
        %430 = vmatprep.subr.mxu0 0.0
        %431 = vmatpush1.msra.mxu0 0.0
        %432 = vmatprep.subr.mxu0 0.0
        %433 = vmatpush1.msra.mxu0 0.0
        %434 = vmatprep.subr.mxu0 0.0
        %435 = vmatpush1.msra.mxu0 0.0
        %436 = vmatprep.subr.mxu0 0.0
        %437 = vmatpush1.msra.mxu0 0.0
        %438 = vmatprep.subr.mxu0 0.0
        %439 = vmatpush1.msra.mxu0 0.0
        %440 = vmatprep.subr.mxu0 0.0
        %441 = vmatpush1.msra.mxu0 0.0
        %442 = vmatprep.subr.mxu0 0.0
        %443 = vmatpush1.msra.mxu0 0.0
        %444 = vmatprep.subr.mxu0 0.0
        %445 = vmatpush1.msra.mxu0 0.0
        %446 = vmatprep.subr.mxu0 0.0
        %447 = vmatpush1.msra.mxu0 0.0
        %448 = vmatprep.subr.mxu0 0.0
        %449 = vmatpush1.msra.mxu0 0.0
        %450 = vmatprep.subr.mxu0 0.0
        %451 = vmatpush1.msra.mxu0 0.0
        %452 = vmatprep.subr.mxu0 0.0
        %453 = vmatpush1.msra.mxu0 0.0
        %454 = vmatprep.subr.mxu0 0.0
        %455 = vmatpush1.msra.mxu0 0.0
        %456 = vmatprep.subr.mxu0 0.0
        %457 = vmatpush1.msra.mxu0 0.0
        %458 = vmatprep.subr.mxu0 0.0
        %459 = vmatpush1.msra.mxu0 0.0
        %460 = vmatprep.subr.mxu0 0.0
        %461 = vmatpush1.msra.mxu0 0.0
        %462 = vmatprep.mubr.f32.mxu0 0.0
        %463 = vmatmul.mubr.f32.gmra.mrb[0].mxu0 %v396
        %v464 = vpop.f32.mrb[0].mxu0
        %v465 = vadd.f32 %v377, %v464
        %v466 = vpop.f32.mrb[0].mxu0
        %v467 = vadd.f32 %v381, %v466
        %468 = vdwg.mxu0
        %469 = vmatprep.subr.mxu0 %v359
        %470 = vmatpush1.msra.mxu0 %v358
        %471 = vmatprep.subr.mxu0 %v363
        %472 = vmatpush1.msra.mxu0 %v362
        %473 = vmatprep.subr.mxu0 %v367
        %474 = vmatpush1.msra.mxu0 %v366
        %475 = vmatprep.subr.mxu0 %v371
        %476 = vmatpush1.msra.mxu0 %v370
        %477 = vmatprep.subr.mxu0 0.0
        %478 = vmatpush1.msra.mxu0 0.0
        %479 = vmatprep.subr.mxu0 0.0
        %480 = vmatpush1.msra.mxu0 0.0
        %481 = vmatprep.subr.mxu0 0.0
        %482 = vmatpush1.msra.mxu0 0.0
        %483 = vmatprep.subr.mxu0 0.0
        %484 = vmatpush1.msra.mxu0 0.0
        %485 = vmatprep.subr.mxu0 0.0
        %486 = vmatpush1.msra.mxu0 0.0
        %487 = vmatprep.subr.mxu0 0.0
        %488 = vmatpush1.msra.mxu0 0.0
        %489 = vmatprep.subr.mxu0 0.0
        %490 = vmatpush1.msra.mxu0 0.0
        %491 = vmatprep.subr.mxu0 0.0
        %492 = vmatpush1.msra.mxu0 0.0
        %493 = vmatprep.subr.mxu0 0.0
        %494 = vmatpush1.msra.mxu0 0.0
        %495 = vmatprep.subr.mxu0 0.0
        %496 = vmatpush1.msra.mxu0 0.0
        %497 = vmatprep.subr.mxu0 0.0
        %498 = vmatpush1.msra.mxu0 0.0
        %499 = vmatprep.subr.mxu0 0.0
        %500 = vmatpush1.msra.mxu0 0.0
        %501 = vmatprep.subr.mxu0 0.0
        %502 = vmatpush1.msra.mxu0 0.0
        %503 = vmatprep.subr.mxu0 0.0
        %504 = vmatpush1.msra.mxu0 0.0
        %505 = vmatprep.subr.mxu0 0.0
        %506 = vmatpush1.msra.mxu0 0.0
        %507 = vmatprep.subr.mxu0 0.0
        %508 = vmatpush1.msra.mxu0 0.0
        %509 = vmatprep.subr.mxu0 0.0
        %510 = vmatpush1.msra.mxu0 0.0
        %511 = vmatprep.subr.mxu0 0.0
        %512 = vmatpush1.msra.mxu0 0.0
        %513 = vmatprep.subr.mxu0 0.0
        %514 = vmatpush1.msra.mxu0 0.0
        %515 = vmatprep.subr.mxu0 0.0
        %516 = vmatpush1.msra.mxu0 0.0
        %517 = vmatprep.subr.mxu0 0.0
        %518 = vmatpush1.msra.mxu0 0.0
        %519 = vmatprep.subr.mxu0 0.0
        %520 = vmatpush1.msra.mxu0 0.0
        %521 = vmatprep.subr.mxu0 0.0
        %522 = vmatpush1.msra.mxu0 0.0
        %523 = vmatprep.subr.mxu0 0.0
        %524 = vmatpush1.msra.mxu0 0.0
        %525 = vmatprep.subr.mxu0 0.0
        %526 = vmatpush1.msra.mxu0 0.0
        %527 = vmatprep.subr.mxu0 0.0
        %528 = vmatpush1.msra.mxu0 0.0
        %529 = vmatprep.subr.mxu0 0.0
        %530 = vmatpush1.msra.mxu0 0.0
        %531 = vmatprep.subr.mxu0 0.0
        %532 = vmatpush1.msra.mxu0 0.0
        %533 = vmatprep.mubr.f32.mxu0 0.0
        %534 = vmatmul.mubr.f32.gmra.mrb[0].mxu0 %v396
        %v535 = vpop.f32.mrb[0].mxu0
        %v536 = vadd.f32 %v385, %v535
        %v537 = vpop.f32.mrb[0].mxu0
        %v538 = vadd.f32 %v389, %v537
        %539 = vdwg.mxu0
        %v540 = vld [vmem:[#allocation8] sm:$0xff]
        %v541 = vld [vmem:[#allocation8 + $0x8] sm:$0xff]
        %v542 = vld [vmem:[#allocation8 + $0x10] sm:$0xff]
        %v543 = vld [vmem:[#allocation8 + $0x18] sm:$0xff]
        %v544 = vld [vmem:[#allocation8 + $0x20] sm:$0xff]
        %v545 = vld [vmem:[#allocation8 + $0x28] sm:$0xff]
        %v546 = vld [vmem:[#allocation8 + $0x30] sm:$0xff]
        %v547 = vld [vmem:[#allocation8 + $0x38] sm:$0xff]
        %v548 = vld [vmem:[#allocation8 + $0x40] sm:$0xff]
        %v549 = vld [vmem:[#allocation8 + $0x48] sm:$0xff]
        %v550 = vld [vmem:[#allocation8 + $0x50] sm:$0xff]
        %v551 = vld [vmem:[#allocation8 + $0x58] sm:$0xff]
        %v552 = vld [vmem:[#allocation8 + $0x60] sm:$0xff]
        %v553 = vld [vmem:[#allocation8 + $0x68] sm:$0xff]
        %v554 = vld [vmem:[#allocation8 + $0x70] sm:$0xff]
        %v555 = vld [vmem:[#allocation8 + $0x78] sm:$0xff]
        %v556 = vld [vmem:[#allocation8 + $0x80] sm:$0xff]
        %v557 = vld [vmem:[#allocation8 + $0x88] sm:$0xff]
        %v558 = vld [vmem:[#allocation8 + $0x90] sm:$0xff]
        %v559 = vld [vmem:[#allocation8 + $0x98] sm:$0xff]
        %v560 = vld [vmem:[#allocation8 + $0xa0] sm:$0xff]
        %v561 = vld [vmem:[#allocation8 + $0xa8] sm:$0xff]
        %v562 = vld [vmem:[#allocation8 + $0xb0] sm:$0xff]
        %v563 = vld [vmem:[#allocation8 + $0xb8] sm:$0xff]
        %v564 = vld [vmem:[#allocation8 + $0xc0] sm:$0xff]
        %v565 = vld [vmem:[#allocation8 + $0xc8] sm:$0xff]
        %v566 = vld [vmem:[#allocation8 + $0xd0] sm:$0xff]
        %v567 = vld [vmem:[#allocation8 + $0xd8] sm:$0xff]
        %v568 = vld [vmem:[#allocation8 + $0xe0] sm:$0xff]
        %v569 = vld [vmem:[#allocation8 + $0xe8] sm:$0xff]
        %v570 = vld [vmem:[#allocation8 + $0xf0] sm:$0xff]
        %v571 = vld [vmem:[#allocation8 + $0xf8] sm:$0xff]
        %v572 = vld [vmem:[#allocation8 + $0x100] sm:$0xff]
        %v573 = vld [vmem:[#allocation8 + $0x108] sm:$0xff]
        %v574 = vld [vmem:[#allocation8 + $0x110] sm:$0xff]
        %v575 = vld [vmem:[#allocation8 + $0x118] sm:$0xff]
        %v576 = vld [vmem:[#allocation8 + $0x120] sm:$0xff]
        %v577 = vld [vmem:[#allocation8 + $0x128] sm:$0xff]
        %v578 = vld [vmem:[#allocation8 + $0x130] sm:$0xff]
        %v579 = vld [vmem:[#allocation8 + $0x138] sm:$0xff]
        %v580 = vld [vmem:[#allocation8 + $0x140] sm:$0xff]
        %v581 = vld [vmem:[#allocation8 + $0x148] sm:$0xff]
        %v582 = vld [vmem:[#allocation8 + $0x150] sm:$0xff]
        %v583 = vld [vmem:[#allocation8 + $0x158] sm:$0xff]
        %v584 = vld [vmem:[#allocation8 + $0x160] sm:$0xff]
        %v585 = vld [vmem:[#allocation8 + $0x168] sm:$0xff]
        %v586 = vld [vmem:[#allocation8 + $0x170] sm:$0xff]
        %v587 = vld [vmem:[#allocation8 + $0x178] sm:$0xff]
        %v588 = vld [vmem:[#allocation8 + $0x180] sm:$0xff]
        %v589 = vld [vmem:[#allocation8 + $0x188] sm:$0xff]
        %v590 = vld [vmem:[#allocation8 + $0x190] sm:$0xff]
        %v591 = vld [vmem:[#allocation8 + $0x198] sm:$0xff]
        %v592 = vld [vmem:[#allocation8 + $0x1a0] sm:$0xff]
        %v593 = vld [vmem:[#allocation8 + $0x1a8] sm:$0xff]
        %v594 = vld [vmem:[#allocation8 + $0x1b0] sm:$0xff]
        %v595 = vld [vmem:[#allocation8 + $0x1b8] sm:$0xff]
        %v596 = vld [vmem:[#allocation8 + $0x1c0] sm:$0xff]
        %v597 = vld [vmem:[#allocation8 + $0x1c8] sm:$0xff]
        %v598 = vld [vmem:[#allocation8 + $0x1d0] sm:$0xff]
        %v599 = vld [vmem:[#allocation8 + $0x1d8] sm:$0xff]
        %v600 = vld [vmem:[#allocation8 + $0x1e0] sm:$0xff]
        %v601 = vld [vmem:[#allocation8 + $0x1e8] sm:$0xff]
        %v602 = vld [vmem:[#allocation8 + $0x1f0] sm:$0xff]
        %v603 = vld [vmem:[#allocation8 + $0x1f8] sm:$0xff]
        %604 = vmatprep.subr.mxu0 %v541
        %605 = vmatpush1.msra.mxu0 %v540
        %606 = vmatprep.subr.mxu0 %v545
        %607 = vmatpush1.msra.mxu0 %v544
        %608 = vmatprep.subr.mxu0 %v549
        %609 = vmatpush1.msra.mxu0 %v548
        %610 = vmatprep.subr.mxu0 %v553
        %611 = vmatpush1.msra.mxu0 %v552
        %612 = vmatprep.subr.mxu0 %v557
        %613 = vmatpush1.msra.mxu0 %v556
        %614 = vmatprep.subr.mxu0 %v561
        %615 = vmatpush1.msra.mxu0 %v560
        %616 = vmatprep.subr.mxu0 %v565
        %617 = vmatpush1.msra.mxu0 %v564
        %618 = vmatprep.subr.mxu0 %v569
        %619 = vmatpush1.msra.mxu0 %v568
        %620 = vmatprep.subr.mxu0 %v573
        %621 = vmatpush1.msra.mxu0 %v572
        %622 = vmatprep.subr.mxu0 %v577
        %623 = vmatpush1.msra.mxu0 %v576
        %624 = vmatprep.subr.mxu0 %v581
        %625 = vmatpush1.msra.mxu0 %v580
        %626 = vmatprep.subr.mxu0 %v585
        %627 = vmatpush1.msra.mxu0 %v584
        %628 = vmatprep.subr.mxu0 %v589
        %629 = vmatpush1.msra.mxu0 %v588
        %630 = vmatprep.subr.mxu0 %v593
        %631 = vmatpush1.msra.mxu0 %v592
        %632 = vmatprep.subr.mxu0 %v597
        %633 = vmatpush1.msra.mxu0 %v596
        %634 = vmatprep.subr.mxu0 %v601
        %635 = vmatpush1.msra.mxu0 %v600
        %636 = vmatprep.subr.mxu0 0.0
        %637 = vmatpush1.msra.mxu0 0.0
        %638 = vmatprep.subr.mxu0 0.0
        %639 = vmatpush1.msra.mxu0 0.0
        %640 = vmatprep.subr.mxu0 0.0
        %641 = vmatpush1.msra.mxu0 0.0
        %642 = vmatprep.subr.mxu0 0.0
        %643 = vmatpush1.msra.mxu0 0.0
        %644 = vmatprep.subr.mxu0 0.0
        %645 = vmatpush1.msra.mxu0 0.0
        %646 = vmatprep.subr.mxu0 0.0
        %647 = vmatpush1.msra.mxu0 0.0
        %648 = vmatprep.subr.mxu0 0.0
        %649 = vmatpush1.msra.mxu0 0.0
        %650 = vmatprep.subr.mxu0 0.0
        %651 = vmatpush1.msra.mxu0 0.0
        %652 = vmatprep.subr.mxu0 0.0
        %653 = vmatpush1.msra.mxu0 0.0
        %654 = vmatprep.subr.mxu0 0.0
        %655 = vmatpush1.msra.mxu0 0.0
        %656 = vmatprep.subr.mxu0 0.0
        %657 = vmatpush1.msra.mxu0 0.0
        %658 = vmatprep.subr.mxu0 0.0
        %659 = vmatpush1.msra.mxu0 0.0
        %660 = vmatprep.subr.mxu0 0.0
        %661 = vmatpush1.msra.mxu0 0.0
        %662 = vmatprep.subr.mxu0 0.0
        %663 = vmatpush1.msra.mxu0 0.0
        %664 = vmatprep.subr.mxu0 0.0
        %665 = vmatpush1.msra.mxu0 0.0
        %666 = vmatprep.subr.mxu0 0.0
        %667 = vmatpush1.msra.mxu0 0.0
        %668 = vmatprep.mubr.f32.mxu0 0.0
        %669 = vmatmul.mubr.f32.gmra.mrb[0].mxu0 0.0
        %v670 = vpop.f32.mrb[0].mxu0
        %v671 = vadd.f32 0.0, %v670
        %v672 = vpop.f32.mrb[0].mxu0
        %v673 = vadd.f32 0.0, %v672
        %674 = vmatprep.mubr.f32.mxu0 0.0
        %675 = vmatmul.mubr.f32.gmra.mrb[0].mxu0 0.0
        %v676 = vpop.f32.mrb[0].mxu0
        %v677 = vadd.f32 0.0, %v676
        %v678 = vpop.f32.mrb[0].mxu0
        %v679 = vadd.f32 0.0, %v678
        %680 = vmatprep.mubr.f32.mxu0 0.0
        %681 = vmatmul.mubr.f32.gmra.mrb[0].mxu0 0.0
        %v682 = vpop.f32.mrb[0].mxu0
        %v683 = vadd.f32 0.0, %v682
        %v684 = vpop.f32.mrb[0].mxu0
        %v685 = vadd.f32 0.0, %v684
        %686 = vmatprep.mubr.f32.mxu0 0.0
        %687 = vmatmul.mubr.f32.gmra.mrb[0].mxu0 0.0
        %v688 = vpop.f32.mrb[0].mxu0
        %v689 = vadd.f32 0.0, %v688
        %v690 = vpop.f32.mrb[0].mxu0
        %v691 = vadd.f32 0.0, %v690
        %692 = vmatprep.mubr.f32.mxu0 0.0
        %693 = vmatmul.mubr.f32.gmra.mrb[0].mxu0 0.0
        %v694 = vpop.f32.mrb[0].mxu0
        %v695 = vadd.f32 0.0, %v694
        %v696 = vpop.f32.mrb[0].mxu0
        %v697 = vadd.f32 0.0, %v696
        %698 = vmatprep.mubr.f32.mxu0 0.0
        %699 = vmatmul.mubr.f32.gmra.mrb[0].mxu0 0.0
        %v700 = vpop.f32.mrb[0].mxu0
        %v701 = vadd.f32 0.0, %v700
        %v702 = vpop.f32.mrb[0].mxu0
        %v703 = vadd.f32 0.0, %v702
        %704 = vmatprep.mubr.f32.mxu0 0.0
        %705 = vmatmul.mubr.f32.gmra.mrb[0].mxu0 0.0
        %v706 = vpop.f32.mrb[0].mxu0
        %v707 = vadd.f32 0.0, %v706
        %v708 = vpop.f32.mrb[0].mxu0
        %v709 = vadd.f32 0.0, %v708
        %710 = vmatprep.mubr.f32.mxu0 0.0
        %711 = vmatmul.mubr.f32.gmra.mrb[0].mxu0 0.0
        %v712 = vpop.f32.mrb[0].mxu0
        %v713 = vadd.f32 0.0, %v712
        %v714 = vpop.f32.mrb[0].mxu0
        %v715 = vadd.f32 0.0, %v714
        %716 = vdwg.mxu0
        %v717 = vrot.slane %v671, 4
        %v718 = vadd.f32 %v671, %v717
        %v719 = vrot.slane %v718, 2
        %v720 = vadd.f32 %v718, %v719
        %v721 = vrot.slane %v720, 1
        %v722 = vadd.f32 %v720, %v721
        %v723 = vrot.slane %v677, 4
        %v724 = vadd.f32 %v677, %v723
        %v725 = vrot.slane %v724, 2
        %v726 = vadd.f32 %v724, %v725
        %v727 = vrot.slane %v726, 1
        %v728 = vadd.f32 %v726, %v727
        %v729 = vrot.slane %v683, 4
        %v730 = vadd.f32 %v683, %v729
        %v731 = vrot.slane %v730, 2
        %v732 = vadd.f32 %v730, %v731
        %v733 = vrot.slane %v732, 1
        %v734 = vadd.f32 %v732, %v733
        %v735 = vrot.slane %v689, 4
        %v736 = vadd.f32 %v689, %v735
        %v737 = vrot.slane %v736, 2
        %v738 = vadd.f32 %v736, %v737
        %v739 = vrot.slane %v738, 1
        %v740 = vadd.f32 %v738, %v739
        %v741 = vrot.slane %v695, 4
        %v742 = vadd.f32 %v695, %v741
        %v743 = vrot.slane %v742, 2
        %v744 = vadd.f32 %v742, %v743
        %v745 = vrot.slane %v744, 1
        %v746 = vadd.f32 %v744, %v745
        %v747 = vrot.slane %v701, 4
        %v748 = vadd.f32 %v701, %v747
        %v749 = vrot.slane %v748, 2
        %v750 = vadd.f32 %v748, %v749
        %v751 = vrot.slane %v750, 1
        %v752 = vadd.f32 %v750, %v751
        %v753 = vrot.slane %v707, 4
        %v754 = vadd.f32 %v707, %v753
        %v755 = vrot.slane %v754, 2
        %v756 = vadd.f32 %v754, %v755
        %v757 = vrot.slane %v756, 1
        %v758 = vadd.f32 %v756, %v757
        %v759 = vrot.slane %v713, 4
        %v760 = vadd.f32 %v713, %v759
        %v761 = vrot.slane %v760, 2
        %v762 = vadd.f32 %v760, %v761
        %v763 = vrot.slane %v762, 1
        %v764 = vadd.f32 %v762, %v763
        %vm773 = vcmask 1041409
        %v774 = vsel %vm773, %v728, %v722
        %vm775 = vcmask 1042434
        %v776 = vsel %vm775, %v734, %v774
        %vm777 = vcmask 1043459
        %v778 = vsel %vm777, %v740, %v776
        %vm779 = vcmask 1044484
        %v780 = vsel %vm779, %v746, %v778
        %vm781 = vcmask 1045509
        %v782 = vsel %vm781, %v752, %v780
        %vm783 = vcmask 1046534
        %v784 = vsel %vm783, %v758, %v782
        %vm785 = vcmask 1047559
        %v786 = vsel %vm785, %v764, %v784
        %v788 = vadd.f32 %v465, %v786
        %v789 = vsub.f32 %v788, %v671
        %v790 = vsub.f32 %v788, %v677
        %v791 = vsub.f32 %v788, %v683
        %v792 = vsub.f32 %v788, %v689
        %v793 = vsub.f32 %v788, %v695
        %v794 = vsub.f32 %v788, %v701
        %v795 = vsub.f32 %v788, %v707
        %v796 = vsub.f32 %v788, %v713
        %v797 = vxor.u32 %v789, 2147483648
        %v798 = vxor.u32 %v790, 2147483648
        %v799 = vxor.u32 %v791, 2147483648
        %v800 = vxor.u32 %v792, 2147483648
        %v801 = vxor.u32 %v793, 2147483648
        %v802 = vxor.u32 %v794, 2147483648
        %v803 = vxor.u32 %v795, 2147483648
        %v804 = vxor.u32 %v796, 2147483648
        %v805 = vmul.f32 %v797, 1.442695
        %v806 = vpow.pop %v805
        %v807 = vmul.f32 %v798, 1.442695
        %v808 = vpow.pop %v807
        %v809 = vmul.f32 %v799, 1.442695
        %v810 = vpow.pop %v809
        %v811 = vmul.f32 %v800, 1.442695
        %v812 = vpow.pop %v811
        %v813 = vmul.f32 %v801, 1.442695
        %v814 = vpow.pop %v813
        %v815 = vmul.f32 %v802, 1.442695
        %v816 = vpow.pop %v815
        %v817 = vmul.f32 %v803, 1.442695
        %v818 = vpow.pop %v817
        %v819 = vmul.f32 %v804, 1.442695
        %v820 = vpow.pop %v819
        %v821 = vadd.f32 %v806, 1.0
        %v822 = vadd.f32 %v808, 1.0
        %v823 = vadd.f32 %v810, 1.0
        %v824 = vadd.f32 %v812, 1.0
        %v825 = vadd.f32 %v814, 1.0
        %v826 = vadd.f32 %v816, 1.0
        %v827 = vadd.f32 %v818, 1.0
        %v828 = vadd.f32 %v820, 1.0
        %v829 = vrcp.pop %v821
        %v830 = vmul.f32 1.0, %v829
        %v831 = vrcp.pop %v822
        %v832 = vmul.f32 1.0, %v831
        %v833 = vrcp.pop %v823
        %v834 = vmul.f32 1.0, %v833
        %v835 = vrcp.pop %v824
        %v836 = vmul.f32 1.0, %v835
        %v837 = vrcp.pop %v825
        %v838 = vmul.f32 1.0, %v837
        %v839 = vrcp.pop %v826
        %v840 = vmul.f32 1.0, %v839
        %v841 = vrcp.pop %v827
        %v842 = vmul.f32 1.0, %v841
        %v843 = vrcp.pop %v828
        %v844 = vmul.f32 1.0, %v843
        %v845 = vadd.f32 %v467, %v673
        %v846 = vadd.f32 %v467, %v679
        %v847 = vadd.f32 %v467, %v685
        %v848 = vadd.f32 %v467, %v691
        %v849 = vadd.f32 %v467, %v697
        %v850 = vadd.f32 %v467, %v703
        %v851 = vadd.f32 %v467, %v709
        %v852 = vadd.f32 %v467, %v715
        %v853 = vxor.u32 %v845, 2147483648
        %v854 = vxor.u32 %v846, 2147483648
        %v855 = vxor.u32 %v847, 2147483648
        %v856 = vxor.u32 %v848, 2147483648
        %v857 = vxor.u32 %v849, 2147483648
        %v858 = vxor.u32 %v850, 2147483648
        %v859 = vxor.u32 %v851, 2147483648
        %v860 = vxor.u32 %v852, 2147483648
        %v861 = vmul.f32 %v853, 1.442695
        %v862 = vpow.pop %v861
        %v863 = vmul.f32 %v854, 1.442695
        %v864 = vpow.pop %v863
        %v865 = vmul.f32 %v855, 1.442695
        %v866 = vpow.pop %v865
        %v867 = vmul.f32 %v856, 1.442695
        %v868 = vpow.pop %v867
        %v869 = vmul.f32 %v857, 1.442695
        %v870 = vpow.pop %v869
        %v871 = vmul.f32 %v858, 1.442695
        %v872 = vpow.pop %v871
        %v873 = vmul.f32 %v859, 1.442695
        %v874 = vpow.pop %v873
        %v875 = vmul.f32 %v860, 1.442695
        %v876 = vpow.pop %v875
        %v877 = vadd.f32 %v862, 1.0
        %v878 = vadd.f32 %v864, 1.0
        %v879 = vadd.f32 %v866, 1.0
        %v880 = vadd.f32 %v868, 1.0
        %v881 = vadd.f32 %v870, 1.0
        %v882 = vadd.f32 %v872, 1.0
        %v883 = vadd.f32 %v874, 1.0
        %v884 = vadd.f32 %v876, 1.0
        %v885 = vrcp.pop %v877
        %v886 = vmul.f32 1.0, %v885
        %v887 = vrcp.pop %v878
        %v888 = vmul.f32 1.0, %v887
        %v889 = vrcp.pop %v879
        %v890 = vmul.f32 1.0, %v889
        %v891 = vrcp.pop %v880
        %v892 = vmul.f32 1.0, %v891
        %v893 = vrcp.pop %v881
        %v894 = vmul.f32 1.0, %v893
        %v895 = vrcp.pop %v882
        %v896 = vmul.f32 1.0, %v895
        %v897 = vrcp.pop %v883
        %v898 = vmul.f32 1.0, %v897
        %v899 = vrcp.pop %v884
        %v900 = vmul.f32 1.0, %v899
        %v901 = vmul.f32 %v886, 0.0
        %v902 = vmul.f32 %v888, 0.0
        %v903 = vmul.f32 %v890, 0.0
        %v904 = vmul.f32 %v892, 0.0
        %v905 = vmul.f32 %v894, 0.0
        %v906 = vmul.f32 %v896, 0.0
        %v907 = vmul.f32 %v898, 0.0
        %v908 = vmul.f32 %v900, 0.0
        %v909 = vadd.f32 %v901, %v902
        %v910 = vadd.f32 %v909, %v903
        %v911 = vadd.f32 %v910, %v904
        %v912 = vadd.f32 %v911, %v905
        %v913 = vadd.f32 %v912, %v906
        %v914 = vadd.f32 %v913, %v907
        %v915 = vadd.f32 %v914, %v908
        %916 = vmatprep.subr.mxu0 0.0
        %917 = vmatpush1.msra.mxu0 %v542
        %918 = vmatprep.subr.mxu0 0.0
        %919 = vmatpush1.msra.mxu0 %v546
        %920 = vmatprep.subr.mxu0 0.0
        %921 = vmatpush1.msra.mxu0 %v550
        %922 = vmatprep.subr.mxu0 0.0
        %923 = vmatpush1.msra.mxu0 %v554
        %924 = vmatprep.subr.mxu0 0.0
        %925 = vmatpush1.msra.mxu0 %v558
        %926 = vmatprep.subr.mxu0 0.0
        %927 = vmatpush1.msra.mxu0 %v562
        %928 = vmatprep.subr.mxu0 0.0
        %929 = vmatpush1.msra.mxu0 %v566
        %930 = vmatprep.subr.mxu0 0.0
        %931 = vmatpush1.msra.mxu0 %v570
        %932 = vmatprep.subr.mxu0 0.0
        %933 = vmatpush1.msra.mxu0 %v574
        %934 = vmatprep.subr.mxu0 0.0
        %935 = vmatpush1.msra.mxu0 %v578
        %936 = vmatprep.subr.mxu0 0.0
        %937 = vmatpush1.msra.mxu0 %v582
        %938 = vmatprep.subr.mxu0 0.0
        %939 = vmatpush1.msra.mxu0 %v586
        %940 = vmatprep.subr.mxu0 0.0
        %941 = vmatpush1.msra.mxu0 %v590
        %942 = vmatprep.subr.mxu0 0.0
        %943 = vmatpush1.msra.mxu0 %v594
        %944 = vmatprep.subr.mxu0 0.0
        %945 = vmatpush1.msra.mxu0 %v598
        %946 = vmatprep.subr.mxu0 0.0
        %947 = vmatpush1.msra.mxu0 %v602
        %948 = vmatprep.subr.mxu0 0.0
        %949 = vmatpush1.msra.mxu0 0.0
        %950 = vmatprep.subr.mxu0 0.0
        %951 = vmatpush1.msra.mxu0 0.0
        %952 = vmatprep.subr.mxu0 0.0
        %953 = vmatpush1.msra.mxu0 0.0
        %954 = vmatprep.subr.mxu0 0.0
        %955 = vmatpush1.msra.mxu0 0.0
        %956 = vmatprep.subr.mxu0 0.0
        %957 = vmatpush1.msra.mxu0 0.0
        %958 = vmatprep.subr.mxu0 0.0
        %959 = vmatpush1.msra.mxu0 0.0
        %960 = vmatprep.subr.mxu0 0.0
        %961 = vmatpush1.msra.mxu0 0.0
        %962 = vmatprep.subr.mxu0 0.0
        %963 = vmatpush1.msra.mxu0 0.0
        %964 = vmatprep.subr.mxu0 0.0
        %965 = vmatpush1.msra.mxu0 0.0
        %966 = vmatprep.subr.mxu0 0.0
        %967 = vmatpush1.msra.mxu0 0.0
        %968 = vmatprep.subr.mxu0 0.0
        %969 = vmatpush1.msra.mxu0 0.0
        %970 = vmatprep.subr.mxu0 0.0
        %971 = vmatpush1.msra.mxu0 0.0
        %972 = vmatprep.subr.mxu0 0.0
        %973 = vmatpush1.msra.mxu0 0.0
        %974 = vmatprep.subr.mxu0 0.0
        %975 = vmatpush1.msra.mxu0 0.0
        %976 = vmatprep.subr.mxu0 0.0
        %977 = vmatpush1.msra.mxu0 0.0
        %978 = vmatprep.subr.mxu0 0.0
        %979 = vmatpush1.msra.mxu0 0.0
        %980 = vmatprep.mubr.f32.mxu0 0.0
        %981 = vmatmul.mubr.f32.gmra.mrb[0].mxu0 %v915
        %v982 = vpop.f32.mrb[0].mxu0
        %v983 = vadd.f32 0.0, %v982
        %v984 = vpop.f32.mrb[0].mxu0
        %985 = vdwg.mxu0
        %v986 = vadd.f32 %v536, %v983
        %v987 = vtanh.pop %v986
        %v988 = vsub.f32 1.0, %v830
        %v989 = vsub.f32 1.0, %v832
        %v990 = vsub.f32 1.0, %v834
        %v991 = vsub.f32 1.0, %v836
        %v992 = vsub.f32 1.0, %v838
        %v993 = vsub.f32 1.0, %v840
        %v994 = vsub.f32 1.0, %v842
        %v995 = vsub.f32 1.0, %v844
        %v997 = vsel %vm775, 0.0, 0.0
        %v998 = vsel %vm777, 0.0, %v997
        %v999 = vsel %vm779, 0.0, %v998
        %v1000 = vsel %vm781, 0.0, %v999
        %v1001 = vsel %vm783, 0.0, %v1000
        %v1002 = vsel %vm785, 0.0, %v1001
        %v1004 = vmul.f32 %v988, %v1002
        %v1005 = vmul.f32 %v989, %v1002
        %v1006 = vmul.f32 %v990, %v1002
        %v1007 = vmul.f32 %v991, %v1002
        %v1008 = vmul.f32 %v992, %v1002
        %v1009 = vmul.f32 %v993, %v1002
        %v1010 = vmul.f32 %v994, %v1002
        %v1011 = vmul.f32 %v995, %v1002
        %v1012 = vmul.f32 %v830, %v987
        %v1013 = vmul.f32 %v832, %v987
        %v1014 = vmul.f32 %v834, %v987
        %v1015 = vmul.f32 %v836, %v987
        %v1016 = vmul.f32 %v838, %v987
        %v1017 = vmul.f32 %v840, %v987
        %v1018 = vmul.f32 %v842, %v987
        %v1019 = vmul.f32 %v844, %v987
        %v1020 = vadd.f32 %v1004, %v1012
        %v1021 = vadd.f32 %v1005, %v1013
        %v1022 = vadd.f32 %v1006, %v1014
        %v1023 = vadd.f32 %v1007, %v1015
        %v1024 = vadd.f32 %v1008, %v1016
        %v1025 = vadd.f32 %v1009, %v1017
        %v1026 = vadd.f32 %v1010, %v1018
        %v1027 = vadd.f32 %v1011, %v1019
        %v1028 = vmul.f32 %v1020, %v348
        %v1029 = vmul.f32 %v1021, %v349
        %v1030 = vmul.f32 %v1022, %v350
        %v1031 = vmul.f32 %v1023, %v351
        %v1032 = vmul.f32 %v1024, %v352
        %v1033 = vmul.f32 %v1025, %v353
        %v1034 = vmul.f32 %v1026, %v354
        %v1035 = vmul.f32 %v1027, %v355
        %1036 = vmatprep.subr.mxu0 %v541
        %1037 = vmatpush1.msra.mxu0 %v540
        %1038 = vmatprep.subr.mxu0 %v545
        %1039 = vmatpush1.msra.mxu0 %v544
        %1040 = vmatprep.subr.mxu0 %v549
        %1041 = vmatpush1.msra.mxu0 %v548
        %1042 = vmatprep.subr.mxu0 %v553
        %1043 = vmatpush1.msra.mxu0 %v552
        %1044 = vmatprep.subr.mxu0 %v557
        %1045 = vmatpush1.msra.mxu0 %v556
        %1046 = vmatprep.subr.mxu0 %v561
        %1047 = vmatpush1.msra.mxu0 %v560
        %1048 = vmatprep.subr.mxu0 %v565
        %1049 = vmatpush1.msra.mxu0 %v564
        %1050 = vmatprep.subr.mxu0 %v569
        %1051 = vmatpush1.msra.mxu0 %v568
        %1052 = vmatprep.subr.mxu0 %v573
        %1053 = vmatpush1.msra.mxu0 %v572
        %1054 = vmatprep.subr.mxu0 %v577
        %1055 = vmatpush1.msra.mxu0 %v576
        %1056 = vmatprep.subr.mxu0 %v581
        %1057 = vmatpush1.msra.mxu0 %v580
        %1058 = vmatprep.subr.mxu0 %v585
        %1059 = vmatpush1.msra.mxu0 %v584
        %1060 = vmatprep.subr.mxu0 %v589
        %1061 = vmatpush1.msra.mxu0 %v588
        %1062 = vmatprep.subr.mxu0 %v593
        %1063 = vmatpush1.msra.mxu0 %v592
        %1064 = vmatprep.subr.mxu0 %v597
        %1065 = vmatpush1.msra.mxu0 %v596
        %1066 = vmatprep.subr.mxu0 %v601
        %1067 = vmatpush1.msra.mxu0 %v600
        %1068 = vmatprep.subr.mxu0 0.0
        %1069 = vmatpush1.msra.mxu0 0.0
        %1070 = vmatprep.subr.mxu0 0.0
        %1071 = vmatpush1.msra.mxu0 0.0
        %1072 = vmatprep.subr.mxu0 0.0
        %1073 = vmatpush1.msra.mxu0 0.0
        %1074 = vmatprep.subr.mxu0 0.0
        %1075 = vmatpush1.msra.mxu0 0.0
        %1076 = vmatprep.subr.mxu0 0.0
        %1077 = vmatpush1.msra.mxu0 0.0
        %1078 = vmatprep.subr.mxu0 0.0
        %1079 = vmatpush1.msra.mxu0 0.0
        %1080 = vmatprep.subr.mxu0 0.0
        %1081 = vmatpush1.msra.mxu0 0.0
        %1082 = vmatprep.subr.mxu0 0.0
        %1083 = vmatpush1.msra.mxu0 0.0
        %1084 = vmatprep.subr.mxu0 0.0
        %1085 = vmatpush1.msra.mxu0 0.0
        %1086 = vmatprep.subr.mxu0 0.0
        %1087 = vmatpush1.msra.mxu0 0.0
        %1088 = vmatprep.subr.mxu0 0.0
        %1089 = vmatpush1.msra.mxu0 0.0
        %1090 = vmatprep.subr.mxu0 0.0
        %1091 = vmatpush1.msra.mxu0 0.0
        %1092 = vmatprep.subr.mxu0 0.0
        %1093 = vmatpush1.msra.mxu0 0.0
        %1094 = vmatprep.subr.mxu0 0.0
        %1095 = vmatpush1.msra.mxu0 0.0
        %1096 = vmatprep.subr.mxu0 0.0
        %1097 = vmatpush1.msra.mxu0 0.0
        %1098 = vmatprep.subr.mxu0 0.0
        %1099 = vmatpush1.msra.mxu0 0.0
        %1100 = vmatprep.mubr.f32.mxu0 0.0
        %1101 = vmatmul.mubr.f32.gmra.mrb[0].mxu0 %v1028
        %v1102 = vpop.f32.mrb[0].mxu0
        %v1103 = vadd.f32 0.0, %v1102
        %v1104 = vpop.f32.mrb[0].mxu0
        %v1105 = vadd.f32 0.0, %v1104
        %1106 = vmatprep.mubr.f32.mxu0 0.0
        %1107 = vmatmul.mubr.f32.gmra.mrb[0].mxu0 %v1029
        %v1108 = vpop.f32.mrb[0].mxu0
        %v1109 = vadd.f32 0.0, %v1108
        %v1110 = vpop.f32.mrb[0].mxu0
        %v1111 = vadd.f32 0.0, %v1110
        %1112 = vmatprep.mubr.f32.mxu0 0.0
        %1113 = vmatmul.mubr.f32.gmra.mrb[0].mxu0 %v1030
        %v1114 = vpop.f32.mrb[0].mxu0
        %v1115 = vadd.f32 0.0, %v1114
        %v1116 = vpop.f32.mrb[0].mxu0
        %v1117 = vadd.f32 0.0, %v1116
        %1118 = vmatprep.mubr.f32.mxu0 0.0
        %1119 = vmatmul.mubr.f32.gmra.mrb[0].mxu0 %v1031
        %v1120 = vpop.f32.mrb[0].mxu0
        %v1121 = vadd.f32 0.0, %v1120
        %v1122 = vpop.f32.mrb[0].mxu0
        %v1123 = vadd.f32 0.0, %v1122
        %1124 = vmatprep.mubr.f32.mxu0 0.0
        %1125 = vmatmul.mubr.f32.gmra.mrb[0].mxu0 %v1032
        %v1126 = vpop.f32.mrb[0].mxu0
        %v1127 = vadd.f32 0.0, %v1126
        %v1128 = vpop.f32.mrb[0].mxu0
        %v1129 = vadd.f32 0.0, %v1128
        %1130 = vmatprep.mubr.f32.mxu0 0.0
        %1131 = vmatmul.mubr.f32.gmra.mrb[0].mxu0 %v1033
        %v1132 = vpop.f32.mrb[0].mxu0
        %v1133 = vadd.f32 0.0, %v1132
        %v1134 = vpop.f32.mrb[0].mxu0
        %v1135 = vadd.f32 0.0, %v1134
        %1136 = vmatprep.mubr.f32.mxu0 0.0
        %1137 = vmatmul.mubr.f32.gmra.mrb[0].mxu0 %v1034
        %v1138 = vpop.f32.mrb[0].mxu0
        %v1139 = vadd.f32 0.0, %v1138
        %v1140 = vpop.f32.mrb[0].mxu0
        %v1141 = vadd.f32 0.0, %v1140
        %1142 = vmatprep.mubr.f32.mxu0 0.0
        %1143 = vmatmul.mubr.f32.gmra.mrb[0].mxu0 %v1035
        %v1144 = vpop.f32.mrb[0].mxu0
        %v1145 = vadd.f32 0.0, %v1144
        %v1146 = vpop.f32.mrb[0].mxu0
        %v1147 = vadd.f32 0.0, %v1146
        %1148 = vdwg.mxu0
        %v1149 = vrot.slane %v1028, 4
        %v1150 = vadd.f32 %v1028, %v1149
        %v1151 = vrot.slane %v1150, 2
        %v1152 = vadd.f32 %v1150, %v1151
        %v1153 = vrot.slane %v1152, 1
        %v1154 = vadd.f32 %v1152, %v1153
        %v1155 = vrot.slane %v1029, 4
        %v1156 = vadd.f32 %v1029, %v1155
        %v1157 = vrot.slane %v1156, 2
        %v1158 = vadd.f32 %v1156, %v1157
        %v1159 = vrot.slane %v1158, 1
        %v1160 = vadd.f32 %v1158, %v1159
        %v1161 = vrot.slane %v1030, 4
        %v1162 = vadd.f32 %v1030, %v1161
        %v1163 = vrot.slane %v1162, 2
        %v1164 = vadd.f32 %v1162, %v1163
        %v1165 = vrot.slane %v1164, 1
        %v1166 = vadd.f32 %v1164, %v1165
        %v1167 = vrot.slane %v1031, 4
        %v1168 = vadd.f32 %v1031, %v1167
        %v1169 = vrot.slane %v1168, 2
        %v1170 = vadd.f32 %v1168, %v1169
        %v1171 = vrot.slane %v1170, 1
        %v1172 = vadd.f32 %v1170, %v1171
        %v1173 = vrot.slane %v1032, 4
        %v1174 = vadd.f32 %v1032, %v1173
        %v1175 = vrot.slane %v1174, 2
        %v1176 = vadd.f32 %v1174, %v1175
        %v1177 = vrot.slane %v1176, 1
        %v1178 = vadd.f32 %v1176, %v1177
        %v1179 = vrot.slane %v1033, 4
        %v1180 = vadd.f32 %v1033, %v1179
        %v1181 = vrot.slane %v1180, 2
        %v1182 = vadd.f32 %v1180, %v1181
        %v1183 = vrot.slane %v1182, 1
        %v1184 = vadd.f32 %v1182, %v1183
        %v1185 = vrot.slane %v1034, 4
        %v1186 = vadd.f32 %v1034, %v1185
        %v1187 = vrot.slane %v1186, 2
        %v1188 = vadd.f32 %v1186, %v1187
        %v1189 = vrot.slane %v1188, 1
        %v1190 = vadd.f32 %v1188, %v1189
        %v1191 = vrot.slane %v1035, 4
        %v1192 = vadd.f32 %v1035, %v1191
        %v1193 = vrot.slane %v1192, 2
        %v1194 = vadd.f32 %v1192, %v1193
        %v1195 = vrot.slane %v1194, 1
        %v1196 = vadd.f32 %v1194, %v1195
        %v1197 = vrot.slane %v1103, 4
        %v1198 = vadd.f32 %v1103, %v1197
        %v1199 = vrot.slane %v1198, 2
        %v1200 = vadd.f32 %v1198, %v1199
        %v1201 = vrot.slane %v1200, 1
        %v1202 = vadd.f32 %v1200, %v1201
        %v1203 = vrot.slane %v1109, 4
        %v1204 = vadd.f32 %v1109, %v1203
        %v1205 = vrot.slane %v1204, 2
        %v1206 = vadd.f32 %v1204, %v1205
        %v1207 = vrot.slane %v1206, 1
        %v1208 = vadd.f32 %v1206, %v1207
        %v1209 = vrot.slane %v1115, 4
        %v1210 = vadd.f32 %v1115, %v1209
        %v1211 = vrot.slane %v1210, 2
        %v1212 = vadd.f32 %v1210, %v1211
        %v1213 = vrot.slane %v1212, 1
        %v1214 = vadd.f32 %v1212, %v1213
        %v1215 = vrot.slane %v1121, 4
        %v1216 = vadd.f32 %v1121, %v1215
        %v1217 = vrot.slane %v1216, 2
        %v1218 = vadd.f32 %v1216, %v1217
        %v1219 = vrot.slane %v1218, 1
        %v1220 = vadd.f32 %v1218, %v1219
        %v1221 = vrot.slane %v1127, 4
        %v1222 = vadd.f32 %v1127, %v1221
        %v1223 = vrot.slane %v1222, 2
        %v1224 = vadd.f32 %v1222, %v1223
        %v1225 = vrot.slane %v1224, 1
        %v1226 = vadd.f32 %v1224, %v1225
        %v1227 = vrot.slane %v1133, 4
        %v1228 = vadd.f32 %v1133, %v1227
        %v1229 = vrot.slane %v1228, 2
        %v1230 = vadd.f32 %v1228, %v1229
        %v1231 = vrot.slane %v1230, 1
        %v1232 = vadd.f32 %v1230, %v1231
        %v1233 = vrot.slane %v1139, 4
        %v1234 = vadd.f32 %v1139, %v1233
        %v1235 = vrot.slane %v1234, 2
        %v1236 = vadd.f32 %v1234, %v1235
        %v1237 = vrot.slane %v1236, 1
        %v1238 = vadd.f32 %v1236, %v1237
        %v1239 = vrot.slane %v1145, 4
        %v1240 = vadd.f32 %v1145, %v1239
        %v1241 = vrot.slane %v1240, 2
        %v1242 = vadd.f32 %v1240, %v1241
        %v1243 = vrot.slane %v1242, 1
        %v1244 = vadd.f32 %v1242, %v1243
        %v1253 = vsel %vm773, %v1208, %v1202
        %v1254 = vsel %vm775, %v1214, %v1253
        %v1255 = vsel %vm777, %v1220, %v1254
        %v1256 = vsel %vm779, %v1226, %v1255
        %v1257 = vsel %vm781, %v1232, %v1256
        %v1258 = vsel %vm783, %v1238, %v1257
        %v1259 = vsel %vm785, %v1244, %v1258
        %v1261 = vadd.f32 %v465, %v1259
        %v1262 = vsub.f32 %v1261, %v1103
        %v1263 = vsub.f32 %v1261, %v1109
        %v1264 = vsub.f32 %v1261, %v1115
        %v1265 = vsub.f32 %v1261, %v1121
        %v1266 = vsub.f32 %v1261, %v1127
        %v1267 = vsub.f32 %v1261, %v1133
        %v1268 = vsub.f32 %v1261, %v1139
        %v1269 = vsub.f32 %v1261, %v1145
        %v1270 = vxor.u32 %v1262, 2147483648
        %v1271 = vxor.u32 %v1263, 2147483648
        %v1272 = vxor.u32 %v1264, 2147483648
        %v1273 = vxor.u32 %v1265, 2147483648
        %v1274 = vxor.u32 %v1266, 2147483648
        %v1275 = vxor.u32 %v1267, 2147483648
        %v1276 = vxor.u32 %v1268, 2147483648
        %v1277 = vxor.u32 %v1269, 2147483648
        %v1278 = vmul.f32 %v1270, 1.442695
        %v1279 = vpow.pop %v1278
        %v1280 = vmul.f32 %v1271, 1.442695
        %v1281 = vpow.pop %v1280
        %v1282 = vmul.f32 %v1272, 1.442695
        %v1283 = vpow.pop %v1282
        %v1284 = vmul.f32 %v1273, 1.442695
        %v1285 = vpow.pop %v1284
        %v1286 = vmul.f32 %v1274, 1.442695
        %v1287 = vpow.pop %v1286
        %v1288 = vmul.f32 %v1275, 1.442695
        %v1289 = vpow.pop %v1288
        %v1290 = vmul.f32 %v1276, 1.442695
        %v1291 = vpow.pop %v1290
        %v1292 = vmul.f32 %v1277, 1.442695
        %v1293 = vpow.pop %v1292
        %v1294 = vadd.f32 %v1279, 1.0
        %v1295 = vadd.f32 %v1281, 1.0
        %v1296 = vadd.f32 %v1283, 1.0
        %v1297 = vadd.f32 %v1285, 1.0
        %v1298 = vadd.f32 %v1287, 1.0
        %v1299 = vadd.f32 %v1289, 1.0
        %v1300 = vadd.f32 %v1291, 1.0
        %v1301 = vadd.f32 %v1293, 1.0
        %v1302 = vrcp.pop %v1294
        %v1303 = vmul.f32 1.0, %v1302
        %v1304 = vrcp.pop %v1295
        %v1305 = vmul.f32 1.0, %v1304
        %v1306 = vrcp.pop %v1296
        %v1307 = vmul.f32 1.0, %v1306
        %v1308 = vrcp.pop %v1297
        %v1309 = vmul.f32 1.0, %v1308
        %v1310 = vrcp.pop %v1298
        %v1311 = vmul.f32 1.0, %v1310
        %v1312 = vrcp.pop %v1299
        %v1313 = vmul.f32 1.0, %v1312
        %v1314 = vrcp.pop %v1300
        %v1315 = vmul.f32 1.0, %v1314
        %v1316 = vrcp.pop %v1301
        %v1317 = vmul.f32 1.0, %v1316
        %v1318 = vadd.f32 %v467, %v1105
        %v1319 = vadd.f32 %v467, %v1111
        %v1320 = vadd.f32 %v467, %v1117
        %v1321 = vadd.f32 %v467, %v1123
        %v1322 = vadd.f32 %v467, %v1129
        %v1323 = vadd.f32 %v467, %v1135
        %v1324 = vadd.f32 %v467, %v1141
        %v1325 = vadd.f32 %v467, %v1147
        %v1326 = vxor.u32 %v1318, 2147483648
        %v1327 = vxor.u32 %v1319, 2147483648
        %v1328 = vxor.u32 %v1320, 2147483648
        %v1329 = vxor.u32 %v1321, 2147483648
        %v1330 = vxor.u32 %v1322, 2147483648
        %v1331 = vxor.u32 %v1323, 2147483648
        %v1332 = vxor.u32 %v1324, 2147483648
        %v1333 = vxor.u32 %v1325, 2147483648
        %v1334 = vmul.f32 %v1326, 1.442695
        %v1335 = vpow.pop %v1334
        %v1336 = vmul.f32 %v1327, 1.442695
        %v1337 = vpow.pop %v1336
        %v1338 = vmul.f32 %v1328, 1.442695
        %v1339 = vpow.pop %v1338
        %v1340 = vmul.f32 %v1329, 1.442695
        %v1341 = vpow.pop %v1340
        %v1342 = vmul.f32 %v1330, 1.442695
        %v1343 = vpow.pop %v1342
        %v1344 = vmul.f32 %v1331, 1.442695
        %v1345 = vpow.pop %v1344
        %v1346 = vmul.f32 %v1332, 1.442695
        %v1347 = vpow.pop %v1346
        %v1348 = vmul.f32 %v1333, 1.442695
        %v1349 = vpow.pop %v1348
        %v1350 = vadd.f32 %v1335, 1.0
        %v1351 = vadd.f32 %v1337, 1.0
        %v1352 = vadd.f32 %v1339, 1.0
        %v1353 = vadd.f32 %v1341, 1.0
        %v1354 = vadd.f32 %v1343, 1.0
        %v1355 = vadd.f32 %v1345, 1.0
        %v1356 = vadd.f32 %v1347, 1.0
        %v1357 = vadd.f32 %v1349, 1.0
        %v1358 = vrcp.pop %v1350
        %v1359 = vmul.f32 1.0, %v1358
        %v1360 = vrcp.pop %v1351
        %v1361 = vmul.f32 1.0, %v1360
        %v1362 = vrcp.pop %v1352
        %v1363 = vmul.f32 1.0, %v1362
        %v1364 = vrcp.pop %v1353
        %v1365 = vmul.f32 1.0, %v1364
        %v1366 = vrcp.pop %v1354
        %v1367 = vmul.f32 1.0, %v1366
        %v1368 = vrcp.pop %v1355
        %v1369 = vmul.f32 1.0, %v1368
        %v1370 = vrcp.pop %v1356
        %v1371 = vmul.f32 1.0, %v1370
        %v1372 = vrcp.pop %v1357
        %v1373 = vmul.f32 1.0, %v1372
        %v1374 = vmul.f32 %v1359, %v1028
        %v1375 = vmul.f32 %v1361, %v1029
        %v1376 = vmul.f32 %v1363, %v1030
        %v1377 = vmul.f32 %v1365, %v1031
        %v1378 = vmul.f32 %v1367, %v1032
        %v1379 = vmul.f32 %v1369, %v1033
        %v1380 = vmul.f32 %v1371, %v1034
        %v1381 = vmul.f32 %v1373, %v1035
        %v1382 = vadd.f32 %v1374, %v1375
        %v1383 = vadd.f32 %v1382, %v1376
        %v1384 = vadd.f32 %v1383, %v1377
        %v1385 = vadd.f32 %v1384, %v1378
        %v1386 = vadd.f32 %v1385, %v1379
        %v1387 = vadd.f32 %v1386, %v1380
        %v1388 = vadd.f32 %v1387, %v1381
        %1389 = vmatprep.subr.mxu0 0.0
        %1390 = vmatpush1.msra.mxu0 %v542
        %1391 = vmatprep.subr.mxu0 0.0
        %1392 = vmatpush1.msra.mxu0 %v546
        %1393 = vmatprep.subr.mxu0 0.0
        %1394 = vmatpush1.msra.mxu0 %v550
        %1395 = vmatprep.subr.mxu0 0.0
        %1396 = vmatpush1.msra.mxu0 %v554
        %1397 = vmatprep.subr.mxu0 0.0
        %1398 = vmatpush1.msra.mxu0 %v558
        %1399 = vmatprep.subr.mxu0 0.0
        %1400 = vmatpush1.msra.mxu0 %v562
        %1401 = vmatprep.subr.mxu0 0.0
        %1402 = vmatpush1.msra.mxu0 %v566
        %1403 = vmatprep.subr.mxu0 0.0
        %1404 = vmatpush1.msra.mxu0 %v570
        %1405 = vmatprep.subr.mxu0 0.0
        %1406 = vmatpush1.msra.mxu0 %v574
        %1407 = vmatprep.subr.mxu0 0.0
        %1408 = vmatpush1.msra.mxu0 %v578
        %1409 = vmatprep.subr.mxu0 0.0
        %1410 = vmatpush1.msra.mxu0 %v582
        %1411 = vmatprep.subr.mxu0 0.0
        %1412 = vmatpush1.msra.mxu0 %v586
        %1413 = vmatprep.subr.mxu0 0.0
        %1414 = vmatpush1.msra.mxu0 %v590
        %1415 = vmatprep.subr.mxu0 0.0
        %1416 = vmatpush1.msra.mxu0 %v594
        %1417 = vmatprep.subr.mxu0 0.0
        %1418 = vmatpush1.msra.mxu0 %v598
        %1419 = vmatprep.subr.mxu0 0.0
        %1420 = vmatpush1.msra.mxu0 %v602
        %1421 = vmatprep.subr.mxu0 0.0
        %1422 = vmatpush1.msra.mxu0 0.0
        %1423 = vmatprep.subr.mxu0 0.0
        %1424 = vmatpush1.msra.mxu0 0.0
        %1425 = vmatprep.subr.mxu0 0.0
        %1426 = vmatpush1.msra.mxu0 0.0
        %1427 = vmatprep.subr.mxu0 0.0
        %1428 = vmatpush1.msra.mxu0 0.0
        %1429 = vmatprep.subr.mxu0 0.0
        %1430 = vmatpush1.msra.mxu0 0.0
        %1431 = vmatprep.subr.mxu0 0.0
        %1432 = vmatpush1.msra.mxu0 0.0
        %1433 = vmatprep.subr.mxu0 0.0
        %1434 = vmatpush1.msra.mxu0 0.0
        %1435 = vmatprep.subr.mxu0 0.0
        %1436 = vmatpush1.msra.mxu0 0.0
        %1437 = vmatprep.subr.mxu0 0.0
        %1438 = vmatpush1.msra.mxu0 0.0
        %1439 = vmatprep.subr.mxu0 0.0
        %1440 = vmatpush1.msra.mxu0 0.0
        %1441 = vmatprep.subr.mxu0 0.0
        %1442 = vmatpush1.msra.mxu0 0.0
        %1443 = vmatprep.subr.mxu0 0.0
        %1444 = vmatpush1.msra.mxu0 0.0
        %1445 = vmatprep.subr.mxu0 0.0
        %1446 = vmatpush1.msra.mxu0 0.0
        %1447 = vmatprep.subr.mxu0 0.0
        %1448 = vmatpush1.msra.mxu0 0.0
        %1449 = vmatprep.subr.mxu0 0.0
        %1450 = vmatpush1.msra.mxu0 0.0
        %1451 = vmatprep.subr.mxu0 0.0
        %1452 = vmatpush1.msra.mxu0 0.0
        %1453 = vmatprep.mubr.f32.mxu0 0.0
        %1454 = vmatmul.mubr.f32.gmra.mrb[0].mxu0 %v1388
        %v1455 = vpop.f32.mrb[0].mxu0
        %v1456 = vadd.f32 0.0, %v1455
        %v1457 = vpop.f32.mrb[0].mxu0
        %1458 = vdwg.mxu0
        %v1459 = vadd.f32 %v536, %v1456
        %v1460 = vtanh.pop %v1459
        %v1469 = vrot.slane %v1028, 1
        %v1470 = vrot.slane %v1028, 2
        %v1471 = vrot.slane %v1028, 3
        %v1472 = vrot.slane %v1028, 4
        %v1473 = vrot.slane %v1028, 5
        %v1474 = vrot.slane %v1028, 6
        %v1475 = vrot.slane %v1028, 7
        %v1476 = vrot.slane %v1029, 1
        %v1477 = vrot.slane %v1029, 2
        %v1478 = vrot.slane %v1029, 3
        %v1479 = vrot.slane %v1029, 4
        %v1480 = vrot.slane %v1029, 5
        %v1481 = vrot.slane %v1029, 6
        %v1482 = vrot.slane %v1029, 7
        %v1483 = vrot.slane %v1030, 1
        %v1484 = vrot.slane %v1030, 2
        %v1485 = vrot.slane %v1030, 3
        %v1486 = vrot.slane %v1030, 4
        %v1487 = vrot.slane %v1030, 5
        %v1488 = vrot.slane %v1030, 6
        %v1489 = vrot.slane %v1030, 7
        %v1490 = vrot.slane %v1031, 1
        %v1491 = vrot.slane %v1031, 2
        %v1492 = vrot.slane %v1031, 3
        %v1493 = vrot.slane %v1031, 4
        %v1494 = vrot.slane %v1031, 5
        %v1495 = vrot.slane %v1031, 6
        %v1496 = vrot.slane %v1031, 7
        %v1497 = vrot.slane %v1032, 1
        %v1498 = vrot.slane %v1032, 2
        %v1499 = vrot.slane %v1032, 3
        %v1500 = vrot.slane %v1032, 4
        %v1501 = vrot.slane %v1032, 5
        %v1502 = vrot.slane %v1032, 6
        %v1503 = vrot.slane %v1032, 7
        %v1504 = vrot.slane %v1033, 1
        %v1505 = vrot.slane %v1033, 2
        %v1506 = vrot.slane %v1033, 3
        %v1507 = vrot.slane %v1033, 4
        %v1508 = vrot.slane %v1033, 5
        %v1509 = vrot.slane %v1033, 6
        %v1510 = vrot.slane %v1033, 7
        %v1511 = vrot.slane %v1034, 1
        %v1512 = vrot.slane %v1034, 2
        %v1513 = vrot.slane %v1034, 3
        %v1514 = vrot.slane %v1034, 4
        %v1515 = vrot.slane %v1034, 5
        %v1516 = vrot.slane %v1034, 6
        %v1517 = vrot.slane %v1034, 7
        %v1518 = vrot.slane %v1035, 1
        %v1519 = vrot.slane %v1035, 2
        %v1520 = vrot.slane %v1035, 3
        %v1521 = vrot.slane %v1035, 4
        %v1522 = vrot.slane %v1035, 5
        %v1523 = vrot.slane %v1035, 6
        %v1524 = vrot.slane %v1035, 7
        %v1589 = vsub.f32 %v1154, %v1028
        %v1590 = vsub.f32 %v1160, %v1469
        %v1591 = vsub.f32 %v1166, %v1470
        %v1592 = vsub.f32 %v1172, %v1471
        %v1593 = vsub.f32 %v1178, %v1472
        %v1594 = vsub.f32 %v1184, %v1473
        %v1595 = vsub.f32 %v1190, %v1474
        %v1596 = vsub.f32 %v1196, %v1475
        %v1597 = vsub.f32 %v1154, %v1029
        %v1598 = vsub.f32 %v1160, %v1476
        %v1599 = vsub.f32 %v1166, %v1477
        %v1600 = vsub.f32 %v1172, %v1478
        %v1601 = vsub.f32 %v1178, %v1479
        %v1602 = vsub.f32 %v1184, %v1480
        %v1603 = vsub.f32 %v1190, %v1481
        %v1604 = vsub.f32 %v1196, %v1482
        %v1605 = vsub.f32 %v1154, %v1030
        %v1606 = vsub.f32 %v1160, %v1483
        %v1607 = vsub.f32 %v1166, %v1484
        %v1608 = vsub.f32 %v1172, %v1485
        %v1609 = vsub.f32 %v1178, %v1486
        %v1610 = vsub.f32 %v1184, %v1487
        %v1611 = vsub.f32 %v1190, %v1488
        %v1612 = vsub.f32 %v1196, %v1489
        %v1613 = vsub.f32 %v1154, %v1031
        %v1614 = vsub.f32 %v1160, %v1490
        %v1615 = vsub.f32 %v1166, %v1491
        %v1616 = vsub.f32 %v1172, %v1492
        %v1617 = vsub.f32 %v1178, %v1493
        %v1618 = vsub.f32 %v1184, %v1494
        %v1619 = vsub.f32 %v1190, %v1495
        %v1620 = vsub.f32 %v1196, %v1496
        %v1621 = vsub.f32 %v1154, %v1032
        %v1622 = vsub.f32 %v1160, %v1497
        %v1623 = vsub.f32 %v1166, %v1498
        %v1624 = vsub.f32 %v1172, %v1499
        %v1625 = vsub.f32 %v1178, %v1500
        %v1626 = vsub.f32 %v1184, %v1501
        %v1627 = vsub.f32 %v1190, %v1502
        %v1628 = vsub.f32 %v1196, %v1503
        %v1629 = vsub.f32 %v1154, %v1033
        %v1630 = vsub.f32 %v1160, %v1504
        %v1631 = vsub.f32 %v1166, %v1505
        %v1632 = vsub.f32 %v1172, %v1506
        %v1633 = vsub.f32 %v1178, %v1507
        %v1634 = vsub.f32 %v1184, %v1508
        %v1635 = vsub.f32 %v1190, %v1509
        %v1636 = vsub.f32 %v1196, %v1510
        %v1637 = vsub.f32 %v1154, %v1034
        %v1638 = vsub.f32 %v1160, %v1511
        %v1639 = vsub.f32 %v1166, %v1512
        %v1640 = vsub.f32 %v1172, %v1513
        %v1641 = vsub.f32 %v1178, %v1514
        %v1642 = vsub.f32 %v1184, %v1515
        %v1643 = vsub.f32 %v1190, %v1516
        %v1644 = vsub.f32 %v1196, %v1517
        %v1645 = vsub.f32 %v1154, %v1035
        %v1646 = vsub.f32 %v1160, %v1518
        %v1647 = vsub.f32 %v1166, %v1519
        %v1648 = vsub.f32 %v1172, %v1520
        %v1649 = vsub.f32 %v1178, %v1521
        %v1650 = vsub.f32 %v1184, %v1522
        %v1651 = vsub.f32 %v1190, %v1523
        %v1652 = vsub.f32 %v1196, %v1524
        %v1653 = vsub.f32 1.0, %v1303
        %v1654 = vsub.f32 1.0, %v1305
        %v1655 = vsub.f32 1.0, %v1307
        %v1656 = vsub.f32 1.0, %v1309
        %v1657 = vsub.f32 1.0, %v1311
        %v1658 = vsub.f32 1.0, %v1313
        %v1659 = vsub.f32 1.0, %v1315
        %v1660 = vsub.f32 1.0, %v1317
        %v1725 = vrot.slane %v1590, 7
        %v1726 = vsel %vm773, %v1725, %v1589
        %v1727 = vrot.slane %v1591, 6
        %v1728 = vsel %vm775, %v1727, %v1726
        %v1729 = vrot.slane %v1592, 5
        %v1730 = vsel %vm777, %v1729, %v1728
        %v1731 = vrot.slane %v1593, 4
        %v1732 = vsel %vm779, %v1731, %v1730
        %v1733 = vrot.slane %v1594, 3
        %v1734 = vsel %vm781, %v1733, %v1732
        %v1735 = vrot.slane %v1595, 2
        %v1736 = vsel %vm783, %v1735, %v1734
        %v1737 = vrot.slane %v1596, 1
        %v1738 = vsel %vm785, %v1737, %v1736
        %v1739 = vrot.slane %v1598, 7
        %v1740 = vsel %vm773, %v1739, %v1597
        %v1741 = vrot.slane %v1599, 6
        %v1742 = vsel %vm775, %v1741, %v1740
        %v1743 = vrot.slane %v1600, 5
        %v1744 = vsel %vm777, %v1743, %v1742
        %v1745 = vrot.slane %v1601, 4
        %v1746 = vsel %vm779, %v1745, %v1744
        %v1747 = vrot.slane %v1602, 3
        %v1748 = vsel %vm781, %v1747, %v1746
        %v1749 = vrot.slane %v1603, 2
        %v1750 = vsel %vm783, %v1749, %v1748
        %v1751 = vrot.slane %v1604, 1
        %v1752 = vsel %vm785, %v1751, %v1750
        %v1753 = vrot.slane %v1606, 7
        %v1754 = vsel %vm773, %v1753, %v1605
        %v1755 = vrot.slane %v1607, 6
        %v1756 = vsel %vm775, %v1755, %v1754
        %v1757 = vrot.slane %v1608, 5
        %v1758 = vsel %vm777, %v1757, %v1756
        %v1759 = vrot.slane %v1609, 4
        %v1760 = vsel %vm779, %v1759, %v1758
        %v1761 = vrot.slane %v1610, 3
        %v1762 = vsel %vm781, %v1761, %v1760
        %v1763 = vrot.slane %v1611, 2
        %v1764 = vsel %vm783, %v1763, %v1762
        %v1765 = vrot.slane %v1612, 1
        %v1766 = vsel %vm785, %v1765, %v1764
        %v1767 = vrot.slane %v1614, 7
        %v1768 = vsel %vm773, %v1767, %v1613
        %v1769 = vrot.slane %v1615, 6
        %v1770 = vsel %vm775, %v1769, %v1768
        %v1771 = vrot.slane %v1616, 5
        %v1772 = vsel %vm777, %v1771, %v1770
        %v1773 = vrot.slane %v1617, 4
        %v1774 = vsel %vm779, %v1773, %v1772
        %v1775 = vrot.slane %v1618, 3
        %v1776 = vsel %vm781, %v1775, %v1774
        %v1777 = vrot.slane %v1619, 2
        %v1778 = vsel %vm783, %v1777, %v1776
        %v1779 = vrot.slane %v1620, 1
        %v1780 = vsel %vm785, %v1779, %v1778
        %v1781 = vrot.slane %v1622, 7
        %v1782 = vsel %vm773, %v1781, %v1621
        %v1783 = vrot.slane %v1623, 6
        %v1784 = vsel %vm775, %v1783, %v1782
        %v1785 = vrot.slane %v1624, 5
        %v1786 = vsel %vm777, %v1785, %v1784
        %v1787 = vrot.slane %v1625, 4
        %v1788 = vsel %vm779, %v1787, %v1786
        %v1789 = vrot.slane %v1626, 3
        %v1790 = vsel %vm781, %v1789, %v1788
        %v1791 = vrot.slane %v1627, 2
        %v1792 = vsel %vm783, %v1791, %v1790
        %v1793 = vrot.slane %v1628, 1
        %v1794 = vsel %vm785, %v1793, %v1792
        %v1795 = vrot.slane %v1630, 7
        %v1796 = vsel %vm773, %v1795, %v1629
        %v1797 = vrot.slane %v1631, 6
        %v1798 = vsel %vm775, %v1797, %v1796
        %v1799 = vrot.slane %v1632, 5
        %v1800 = vsel %vm777, %v1799, %v1798
        %v1801 = vrot.slane %v1633, 4
        %v1802 = vsel %vm779, %v1801, %v1800
        %v1803 = vrot.slane %v1634, 3
        %v1804 = vsel %vm781, %v1803, %v1802
        %v1805 = vrot.slane %v1635, 2
        %v1806 = vsel %vm783, %v1805, %v1804
        %v1807 = vrot.slane %v1636, 1
        %v1808 = vsel %vm785, %v1807, %v1806
        %v1809 = vrot.slane %v1638, 7
        %v1810 = vsel %vm773, %v1809, %v1637
        %v1811 = vrot.slane %v1639, 6
        %v1812 = vsel %vm775, %v1811, %v1810
        %v1813 = vrot.slane %v1640, 5
        %v1814 = vsel %vm777, %v1813, %v1812
        %v1815 = vrot.slane %v1641, 4
        %v1816 = vsel %vm779, %v1815, %v1814
        %v1817 = vrot.slane %v1642, 3
        %v1818 = vsel %vm781, %v1817, %v1816
        %v1819 = vrot.slane %v1643, 2
        %v1820 = vsel %vm783, %v1819, %v1818
        %v1821 = vrot.slane %v1644, 1
        %v1822 = vsel %vm785, %v1821, %v1820
        %v1823 = vrot.slane %v1646, 7
        %v1824 = vsel %vm773, %v1823, %v1645
        %v1825 = vrot.slane %v1647, 6
        %v1826 = vsel %vm775, %v1825, %v1824
        %v1827 = vrot.slane %v1648, 5
        %v1828 = vsel %vm777, %v1827, %v1826
        %v1829 = vrot.slane %v1649, 4
        %v1830 = vsel %vm779, %v1829, %v1828
        %v1831 = vrot.slane %v1650, 3
        %v1832 = vsel %vm781, %v1831, %v1830
        %v1833 = vrot.slane %v1651, 2
        %v1834 = vsel %vm783, %v1833, %v1832
        %v1835 = vrot.slane %v1652, 1
        %v1836 = vsel %vm785, %v1835, %v1834
        %v1845 = vmul.f32 %v1653, %v1738
        %v1846 = vmul.f32 %v1654, %v1752
        %v1847 = vmul.f32 %v1655, %v1766
        %v1848 = vmul.f32 %v1656, %v1780
        %v1849 = vmul.f32 %v1657, %v1794
        %v1850 = vmul.f32 %v1658, %v1808
        %v1851 = vmul.f32 %v1659, %v1822
        %v1852 = vmul.f32 %v1660, %v1836
        %v1853 = vmul.f32 %v1303, %v1460
        %v1854 = vmul.f32 %v1305, %v1460
        %v1855 = vmul.f32 %v1307, %v1460
        %v1856 = vmul.f32 %v1309, %v1460
        %v1857 = vmul.f32 %v1311, %v1460
        %v1858 = vmul.f32 %v1313, %v1460
        %v1859 = vmul.f32 %v1315, %v1460
        %v1860 = vmul.f32 %v1317, %v1460
        %v1861 = vadd.f32 %v1845, %v1853
        %v1862 = vadd.f32 %v1846, %v1854
        %v1863 = vadd.f32 %v1847, %v1855
        %v1864 = vadd.f32 %v1848, %v1856
        %v1865 = vadd.f32 %v1849, %v1857
        %v1866 = vadd.f32 %v1850, %v1858
        %v1867 = vadd.f32 %v1851, %v1859
        %v1868 = vadd.f32 %v1852, %v1860
        %v1869 = vmul.f32 %v1861, %v348
        %v1870 = vmul.f32 %v1862, %v349
        %v1871 = vmul.f32 %v1863, %v350
        %v1872 = vmul.f32 %v1864, %v351
        %v1873 = vmul.f32 %v1865, %v352
        %v1874 = vmul.f32 %v1866, %v353
        %v1875 = vmul.f32 %v1867, %v354
        %v1876 = vmul.f32 %v1868, %v355
        %1877 = vmatprep.subr.mxu0 %v541
        %1878 = vmatpush1.msra.mxu0 %v540
        %1879 = vmatprep.subr.mxu0 %v545
        %1880 = vmatpush1.msra.mxu0 %v544
        %1881 = vmatprep.subr.mxu0 %v549
        %1882 = vmatpush1.msra.mxu0 %v548
        %1883 = vmatprep.subr.mxu0 %v553
        %1884 = vmatpush1.msra.mxu0 %v552
        %1885 = vmatprep.subr.mxu0 %v557
        %1886 = vmatpush1.msra.mxu0 %v556
        %1887 = vmatprep.subr.mxu0 %v561
        %1888 = vmatpush1.msra.mxu0 %v560
        %1889 = vmatprep.subr.mxu0 %v565
        %1890 = vmatpush1.msra.mxu0 %v564
        %1891 = vmatprep.subr.mxu0 %v569
        %1892 = vmatpush1.msra.mxu0 %v568
        %1893 = vmatprep.subr.mxu0 %v573
        %1894 = vmatpush1.msra.mxu0 %v572
        %1895 = vmatprep.subr.mxu0 %v577
        %1896 = vmatpush1.msra.mxu0 %v576
        %1897 = vmatprep.subr.mxu0 %v581
        %1898 = vmatpush1.msra.mxu0 %v580
        %1899 = vmatprep.subr.mxu0 %v585
        %1900 = vmatpush1.msra.mxu0 %v584
        %1901 = vmatprep.subr.mxu0 %v589
        %1902 = vmatpush1.msra.mxu0 %v588
        %1903 = vmatprep.subr.mxu0 %v593
        %1904 = vmatpush1.msra.mxu0 %v592
        %1905 = vmatprep.subr.mxu0 %v597
        %1906 = vmatpush1.msra.mxu0 %v596
        %1907 = vmatprep.subr.mxu0 %v601
        %1908 = vmatpush1.msra.mxu0 %v600
        %1909 = vmatprep.subr.mxu0 0.0
        %1910 = vmatpush1.msra.mxu0 0.0
        %1911 = vmatprep.subr.mxu0 0.0
        %1912 = vmatpush1.msra.mxu0 0.0
        %1913 = vmatprep.subr.mxu0 0.0
        %1914 = vmatpush1.msra.mxu0 0.0
        %1915 = vmatprep.subr.mxu0 0.0
        %1916 = vmatpush1.msra.mxu0 0.0
        %1917 = vmatprep.subr.mxu0 0.0
        %1918 = vmatpush1.msra.mxu0 0.0
        %1919 = vmatprep.subr.mxu0 0.0
        %1920 = vmatpush1.msra.mxu0 0.0
        %1921 = vmatprep.subr.mxu0 0.0
        %1922 = vmatpush1.msra.mxu0 0.0
        %1923 = vmatprep.subr.mxu0 0.0
        %1924 = vmatpush1.msra.mxu0 0.0
        %1925 = vmatprep.subr.mxu0 0.0
        %1926 = vmatpush1.msra.mxu0 0.0
        %1927 = vmatprep.subr.mxu0 0.0
        %1928 = vmatpush1.msra.mxu0 0.0
        %1929 = vmatprep.subr.mxu0 0.0
        %1930 = vmatpush1.msra.mxu0 0.0
        %1931 = vmatprep.subr.mxu0 0.0
        %1932 = vmatpush1.msra.mxu0 0.0
        %1933 = vmatprep.subr.mxu0 0.0
        %1934 = vmatpush1.msra.mxu0 0.0
        %1935 = vmatprep.subr.mxu0 0.0
        %1936 = vmatpush1.msra.mxu0 0.0
        %1937 = vmatprep.subr.mxu0 0.0
        %1938 = vmatpush1.msra.mxu0 0.0
        %1939 = vmatprep.subr.mxu0 0.0
        %1940 = vmatpush1.msra.mxu0 0.0
        %1941 = vmatprep.mubr.f32.mxu0 0.0
        %1942 = vmatmul.mubr.f32.gmra.mrb[0].mxu0 %v1869
        %v1943 = vpop.f32.mrb[0].mxu0
        %v1944 = vadd.f32 0.0, %v1943
        %v1945 = vpop.f32.mrb[0].mxu0
        %v1946 = vadd.f32 0.0, %v1945
        %1947 = vmatprep.mubr.f32.mxu0 0.0
        %1948 = vmatmul.mubr.f32.gmra.mrb[0].mxu0 %v1870
        %v1949 = vpop.f32.mrb[0].mxu0
        %v1950 = vadd.f32 0.0, %v1949
        %v1951 = vpop.f32.mrb[0].mxu0
        %v1952 = vadd.f32 0.0, %v1951
        %1953 = vmatprep.mubr.f32.mxu0 0.0
        %1954 = vmatmul.mubr.f32.gmra.mrb[0].mxu0 %v1871
        %v1955 = vpop.f32.mrb[0].mxu0
        %v1956 = vadd.f32 0.0, %v1955
        %v1957 = vpop.f32.mrb[0].mxu0
        %v1958 = vadd.f32 0.0, %v1957
        %1959 = vmatprep.mubr.f32.mxu0 0.0
        %1960 = vmatmul.mubr.f32.gmra.mrb[0].mxu0 %v1872
        %v1961 = vpop.f32.mrb[0].mxu0
        %v1962 = vadd.f32 0.0, %v1961
        %v1963 = vpop.f32.mrb[0].mxu0
        %v1964 = vadd.f32 0.0, %v1963
        %1965 = vmatprep.mubr.f32.mxu0 0.0
        %1966 = vmatmul.mubr.f32.gmra.mrb[0].mxu0 %v1873
        %v1967 = vpop.f32.mrb[0].mxu0
        %v1968 = vadd.f32 0.0, %v1967
        %v1969 = vpop.f32.mrb[0].mxu0
        %v1970 = vadd.f32 0.0, %v1969
        %1971 = vmatprep.mubr.f32.mxu0 0.0
        %1972 = vmatmul.mubr.f32.gmra.mrb[0].mxu0 %v1874
        %v1973 = vpop.f32.mrb[0].mxu0
        %v1974 = vadd.f32 0.0, %v1973
        %v1975 = vpop.f32.mrb[0].mxu0
        %v1976 = vadd.f32 0.0, %v1975
        %1977 = vmatprep.mubr.f32.mxu0 0.0
        %1978 = vmatmul.mubr.f32.gmra.mrb[0].mxu0 %v1875
        %v1979 = vpop.f32.mrb[0].mxu0
        %v1980 = vadd.f32 0.0, %v1979
        %v1981 = vpop.f32.mrb[0].mxu0
        %v1982 = vadd.f32 0.0, %v1981
        %1983 = vmatprep.mubr.f32.mxu0 0.0
        %1984 = vmatmul.mubr.f32.gmra.mrb[0].mxu0 %v1876
        %v1985 = vpop.f32.mrb[0].mxu0
        %v1986 = vadd.f32 0.0, %v1985
        %v1987 = vpop.f32.mrb[0].mxu0
        %v1988 = vadd.f32 0.0, %v1987
        %1989 = vdwg.mxu0
        %v1990 = vrot.slane %v1869, 4
        %v1991 = vadd.f32 %v1869, %v1990
        %v1992 = vrot.slane %v1991, 2
        %v1993 = vadd.f32 %v1991, %v1992
        %v1994 = vrot.slane %v1993, 1
        %v1995 = vadd.f32 %v1993, %v1994
        %v1996 = vrot.slane %v1870, 4
        %v1997 = vadd.f32 %v1870, %v1996
        %v1998 = vrot.slane %v1997, 2
        %v1999 = vadd.f32 %v1997, %v1998
        %v2000 = vrot.slane %v1999, 1
        %v2001 = vadd.f32 %v1999, %v2000
        %v2002 = vrot.slane %v1871, 4
        %v2003 = vadd.f32 %v1871, %v2002
        %v2004 = vrot.slane %v2003, 2
        %v2005 = vadd.f32 %v2003, %v2004
        %v2006 = vrot.slane %v2005, 1
        %v2007 = vadd.f32 %v2005, %v2006
        %v2008 = vrot.slane %v1872, 4
        %v2009 = vadd.f32 %v1872, %v2008
        %v2010 = vrot.slane %v2009, 2
        %v2011 = vadd.f32 %v2009, %v2010
        %v2012 = vrot.slane %v2011, 1
        %v2013 = vadd.f32 %v2011, %v2012
        %v2014 = vrot.slane %v1873, 4
        %v2015 = vadd.f32 %v1873, %v2014
        %v2016 = vrot.slane %v2015, 2
        %v2017 = vadd.f32 %v2015, %v2016
        %v2018 = vrot.slane %v2017, 1
        %v2019 = vadd.f32 %v2017, %v2018
        %v2020 = vrot.slane %v1874, 4
        %v2021 = vadd.f32 %v1874, %v2020
        %v2022 = vrot.slane %v2021, 2
        %v2023 = vadd.f32 %v2021, %v2022
        %v2024 = vrot.slane %v2023, 1
        %v2025 = vadd.f32 %v2023, %v2024
        %v2026 = vrot.slane %v1875, 4
        %v2027 = vadd.f32 %v1875, %v2026
        %v2028 = vrot.slane %v2027, 2
        %v2029 = vadd.f32 %v2027, %v2028
        %v2030 = vrot.slane %v2029, 1
        %v2031 = vadd.f32 %v2029, %v2030
        %v2032 = vrot.slane %v1876, 4
        %v2033 = vadd.f32 %v1876, %v2032
        %v2034 = vrot.slane %v2033, 2
        %v2035 = vadd.f32 %v2033, %v2034
        %v2036 = vrot.slane %v2035, 1
        %v2037 = vadd.f32 %v2035, %v2036
        %v2038 = vrot.slane %v1944, 4
        %v2039 = vadd.f32 %v1944, %v2038
        %v2040 = vrot.slane %v2039, 2
        %v2041 = vadd.f32 %v2039, %v2040
        %v2042 = vrot.slane %v2041, 1
        %v2043 = vadd.f32 %v2041, %v2042
        %v2044 = vrot.slane %v1950, 4
        %v2045 = vadd.f32 %v1950, %v2044
        %v2046 = vrot.slane %v2045, 2
        %v2047 = vadd.f32 %v2045, %v2046
        %v2048 = vrot.slane %v2047, 1
        %v2049 = vadd.f32 %v2047, %v2048
        %v2050 = vrot.slane %v1956, 4
        %v2051 = vadd.f32 %v1956, %v2050
        %v2052 = vrot.slane %v2051, 2
        %v2053 = vadd.f32 %v2051, %v2052
        %v2054 = vrot.slane %v2053, 1
        %v2055 = vadd.f32 %v2053, %v2054
        %v2056 = vrot.slane %v1962, 4
        %v2057 = vadd.f32 %v1962, %v2056
        %v2058 = vrot.slane %v2057, 2
        %v2059 = vadd.f32 %v2057, %v2058
        %v2060 = vrot.slane %v2059, 1
        %v2061 = vadd.f32 %v2059, %v2060
        %v2062 = vrot.slane %v1968, 4
        %v2063 = vadd.f32 %v1968, %v2062
        %v2064 = vrot.slane %v2063, 2
        %v2065 = vadd.f32 %v2063, %v2064
        %v2066 = vrot.slane %v2065, 1
        %v2067 = vadd.f32 %v2065, %v2066
        %v2068 = vrot.slane %v1974, 4
        %v2069 = vadd.f32 %v1974, %v2068
        %v2070 = vrot.slane %v2069, 2
        %v2071 = vadd.f32 %v2069, %v2070
        %v2072 = vrot.slane %v2071, 1
        %v2073 = vadd.f32 %v2071, %v2072
        %v2074 = vrot.slane %v1980, 4
        %v2075 = vadd.f32 %v1980, %v2074
        %v2076 = vrot.slane %v2075, 2
        %v2077 = vadd.f32 %v2075, %v2076
        %v2078 = vrot.slane %v2077, 1
        %v2079 = vadd.f32 %v2077, %v2078
        %v2080 = vrot.slane %v1986, 4
        %v2081 = vadd.f32 %v1986, %v2080
        %v2082 = vrot.slane %v2081, 2
        %v2083 = vadd.f32 %v2081, %v2082
        %v2084 = vrot.slane %v2083, 1
        %v2085 = vadd.f32 %v2083, %v2084
        %v2094 = vsel %vm773, %v2049, %v2043
        %v2095 = vsel %vm775, %v2055, %v2094
        %v2096 = vsel %vm777, %v2061, %v2095
        %v2097 = vsel %vm779, %v2067, %v2096
        %v2098 = vsel %vm781, %v2073, %v2097
        %v2099 = vsel %vm783, %v2079, %v2098
        %v2100 = vsel %vm785, %v2085, %v2099
        %v2102 = vadd.f32 %v465, %v2100
        %v2103 = vsub.f32 %v2102, %v1944
        %v2104 = vsub.f32 %v2102, %v1950
        %v2105 = vsub.f32 %v2102, %v1956
        %v2106 = vsub.f32 %v2102, %v1962
        %v2107 = vsub.f32 %v2102, %v1968
        %v2108 = vsub.f32 %v2102, %v1974
        %v2109 = vsub.f32 %v2102, %v1980
        %v2110 = vsub.f32 %v2102, %v1986
        %v2111 = vxor.u32 %v2103, 2147483648
        %v2112 = vxor.u32 %v2104, 2147483648
        %v2113 = vxor.u32 %v2105, 2147483648
        %v2114 = vxor.u32 %v2106, 2147483648
        %v2115 = vxor.u32 %v2107, 2147483648
        %v2116 = vxor.u32 %v2108, 2147483648
        %v2117 = vxor.u32 %v2109, 2147483648
        %v2118 = vxor.u32 %v2110, 2147483648
        %v2119 = vmul.f32 %v2111, 1.442695
        %v2120 = vpow.pop %v2119
        %v2121 = vmul.f32 %v2112, 1.442695
        %v2122 = vpow.pop %v2121
        %v2123 = vmul.f32 %v2113, 1.442695
        %v2124 = vpow.pop %v2123
        %v2125 = vmul.f32 %v2114, 1.442695
        %v2126 = vpow.pop %v2125
        %v2127 = vmul.f32 %v2115, 1.442695
        %v2128 = vpow.pop %v2127
        %v2129 = vmul.f32 %v2116, 1.442695
        %v2130 = vpow.pop %v2129
        %v2131 = vmul.f32 %v2117, 1.442695
        %v2132 = vpow.pop %v2131
        %v2133 = vmul.f32 %v2118, 1.442695
        %v2134 = vpow.pop %v2133
        %v2135 = vadd.f32 %v2120, 1.0
        %v2136 = vadd.f32 %v2122, 1.0
        %v2137 = vadd.f32 %v2124, 1.0
        %v2138 = vadd.f32 %v2126, 1.0
        %v2139 = vadd.f32 %v2128, 1.0
        %v2140 = vadd.f32 %v2130, 1.0
        %v2141 = vadd.f32 %v2132, 1.0
        %v2142 = vadd.f32 %v2134, 1.0
        %v2143 = vrcp.pop %v2135
        %v2144 = vmul.f32 1.0, %v2143
        %v2145 = vrcp.pop %v2136
        %v2146 = vmul.f32 1.0, %v2145
        %v2147 = vrcp.pop %v2137
        %v2148 = vmul.f32 1.0, %v2147
        %v2149 = vrcp.pop %v2138
        %v2150 = vmul.f32 1.0, %v2149
        %v2151 = vrcp.pop %v2139
        %v2152 = vmul.f32 1.0, %v2151
        %v2153 = vrcp.pop %v2140
        %v2154 = vmul.f32 1.0, %v2153
        %v2155 = vrcp.pop %v2141
        %v2156 = vmul.f32 1.0, %v2155
        %v2157 = vrcp.pop %v2142
        %v2158 = vmul.f32 1.0, %v2157
        %v2159 = vadd.f32 %v467, %v1946
        %v2160 = vadd.f32 %v467, %v1952
        %v2161 = vadd.f32 %v467, %v1958
        %v2162 = vadd.f32 %v467, %v1964
        %v2163 = vadd.f32 %v467, %v1970
        %v2164 = vadd.f32 %v467, %v1976
        %v2165 = vadd.f32 %v467, %v1982
        %v2166 = vadd.f32 %v467, %v1988
        %v2167 = vxor.u32 %v2159, 2147483648
        %v2168 = vxor.u32 %v2160, 2147483648
        %v2169 = vxor.u32 %v2161, 2147483648
        %v2170 = vxor.u32 %v2162, 2147483648
        %v2171 = vxor.u32 %v2163, 2147483648
        %v2172 = vxor.u32 %v2164, 2147483648
        %v2173 = vxor.u32 %v2165, 2147483648
        %v2174 = vxor.u32 %v2166, 2147483648
        %v2175 = vmul.f32 %v2167, 1.442695
        %v2176 = vpow.pop %v2175
        %v2177 = vmul.f32 %v2168, 1.442695
        %v2178 = vpow.pop %v2177
        %v2179 = vmul.f32 %v2169, 1.442695
        %v2180 = vpow.pop %v2179
        %v2181 = vmul.f32 %v2170, 1.442695
        %v2182 = vpow.pop %v2181
        %v2183 = vmul.f32 %v2171, 1.442695
        %v2184 = vpow.pop %v2183
        %v2185 = vmul.f32 %v2172, 1.442695
        %v2186 = vpow.pop %v2185
        %v2187 = vmul.f32 %v2173, 1.442695
        %v2188 = vpow.pop %v2187
        %v2189 = vmul.f32 %v2174, 1.442695
        %v2190 = vpow.pop %v2189
        %v2191 = vadd.f32 %v2176, 1.0
        %v2192 = vadd.f32 %v2178, 1.0
        %v2193 = vadd.f32 %v2180, 1.0
        %v2194 = vadd.f32 %v2182, 1.0
        %v2195 = vadd.f32 %v2184, 1.0
        %v2196 = vadd.f32 %v2186, 1.0
        %v2197 = vadd.f32 %v2188, 1.0
        %v2198 = vadd.f32 %v2190, 1.0
        %v2199 = vrcp.pop %v2191
        %v2200 = vmul.f32 1.0, %v2199
        %v2201 = vrcp.pop %v2192
        %v2202 = vmul.f32 1.0, %v2201
        %v2203 = vrcp.pop %v2193
        %v2204 = vmul.f32 1.0, %v2203
        %v2205 = vrcp.pop %v2194
        %v2206 = vmul.f32 1.0, %v2205
        %v2207 = vrcp.pop %v2195
        %v2208 = vmul.f32 1.0, %v2207
        %v2209 = vrcp.pop %v2196
        %v2210 = vmul.f32 1.0, %v2209
        %v2211 = vrcp.pop %v2197
        %v2212 = vmul.f32 1.0, %v2211
        %v2213 = vrcp.pop %v2198
        %v2214 = vmul.f32 1.0, %v2213
        %v2215 = vmul.f32 %v2200, %v1869
        %v2216 = vmul.f32 %v2202, %v1870
        %v2217 = vmul.f32 %v2204, %v1871
        %v2218 = vmul.f32 %v2206, %v1872
        %v2219 = vmul.f32 %v2208, %v1873
        %v2220 = vmul.f32 %v2210, %v1874
        %v2221 = vmul.f32 %v2212, %v1875
        %v2222 = vmul.f32 %v2214, %v1876
        %v2223 = vadd.f32 %v2215, %v2216
        %v2224 = vadd.f32 %v2223, %v2217
        %v2225 = vadd.f32 %v2224, %v2218
        %v2226 = vadd.f32 %v2225, %v2219
        %v2227 = vadd.f32 %v2226, %v2220
        %v2228 = vadd.f32 %v2227, %v2221
        %v2229 = vadd.f32 %v2228, %v2222
        %2230 = vmatprep.subr.mxu0 0.0
        %2231 = vmatpush1.msra.mxu0 %v542
        %2232 = vmatprep.subr.mxu0 0.0
        %2233 = vmatpush1.msra.mxu0 %v546
        %2234 = vmatprep.subr.mxu0 0.0
        %2235 = vmatpush1.msra.mxu0 %v550
        %2236 = vmatprep.subr.mxu0 0.0
        %2237 = vmatpush1.msra.mxu0 %v554
        %2238 = vmatprep.subr.mxu0 0.0
        %2239 = vmatpush1.msra.mxu0 %v558
        %2240 = vmatprep.subr.mxu0 0.0
        %2241 = vmatpush1.msra.mxu0 %v562
        %2242 = vmatprep.subr.mxu0 0.0
        %2243 = vmatpush1.msra.mxu0 %v566
        %2244 = vmatprep.subr.mxu0 0.0
        %2245 = vmatpush1.msra.mxu0 %v570
        %2246 = vmatprep.subr.mxu0 0.0
        %2247 = vmatpush1.msra.mxu0 %v574
        %2248 = vmatprep.subr.mxu0 0.0
        %2249 = vmatpush1.msra.mxu0 %v578
        %2250 = vmatprep.subr.mxu0 0.0
        %2251 = vmatpush1.msra.mxu0 %v582
        %2252 = vmatprep.subr.mxu0 0.0
        %2253 = vmatpush1.msra.mxu0 %v586
        %2254 = vmatprep.subr.mxu0 0.0
        %2255 = vmatpush1.msra.mxu0 %v590
        %2256 = vmatprep.subr.mxu0 0.0
        %2257 = vmatpush1.msra.mxu0 %v594
        %2258 = vmatprep.subr.mxu0 0.0
        %2259 = vmatpush1.msra.mxu0 %v598
        %2260 = vmatprep.subr.mxu0 0.0
        %2261 = vmatpush1.msra.mxu0 %v602
        %2262 = vmatprep.subr.mxu0 0.0
        %2263 = vmatpush1.msra.mxu0 0.0
        %2264 = vmatprep.subr.mxu0 0.0
        %2265 = vmatpush1.msra.mxu0 0.0
        %2266 = vmatprep.subr.mxu0 0.0
        %2267 = vmatpush1.msra.mxu0 0.0
        %2268 = vmatprep.subr.mxu0 0.0
        %2269 = vmatpush1.msra.mxu0 0.0
        %2270 = vmatprep.subr.mxu0 0.0
        %2271 = vmatpush1.msra.mxu0 0.0
        %2272 = vmatprep.subr.mxu0 0.0
        %2273 = vmatpush1.msra.mxu0 0.0
        %2274 = vmatprep.subr.mxu0 0.0
        %2275 = vmatpush1.msra.mxu0 0.0
        %2276 = vmatprep.subr.mxu0 0.0
        %2277 = vmatpush1.msra.mxu0 0.0
        %2278 = vmatprep.subr.mxu0 0.0
        %2279 = vmatpush1.msra.mxu0 0.0
        %2280 = vmatprep.subr.mxu0 0.0
        %2281 = vmatpush1.msra.mxu0 0.0
        %2282 = vmatprep.subr.mxu0 0.0
        %2283 = vmatpush1.msra.mxu0 0.0
        %2284 = vmatprep.subr.mxu0 0.0
        %2285 = vmatpush1.msra.mxu0 0.0
        %2286 = vmatprep.subr.mxu0 0.0
        %2287 = vmatpush1.msra.mxu0 0.0
        %2288 = vmatprep.subr.mxu0 0.0
        %2289 = vmatpush1.msra.mxu0 0.0
        %2290 = vmatprep.subr.mxu0 0.0
        %2291 = vmatpush1.msra.mxu0 0.0
        %2292 = vmatprep.subr.mxu0 0.0
        %2293 = vmatpush1.msra.mxu0 0.0
        %2294 = vmatprep.mubr.f32.mxu0 0.0
        %2295 = vmatmul.mubr.f32.gmra.mrb[0].mxu0 %v2229
        %v2296 = vpop.f32.mrb[0].mxu0
        %v2297 = vadd.f32 0.0, %v2296
        %v2298 = vpop.f32.mrb[0].mxu0
        %2299 = vdwg.mxu0
        %v2300 = vadd.f32 %v536, %v2297
        %v2301 = vtanh.pop %v2300
        %v2310 = vrot.slane %v1869, 1
        %v2311 = vrot.slane %v1869, 2
        %v2312 = vrot.slane %v1869, 3
        %v2313 = vrot.slane %v1869, 4
        %v2314 = vrot.slane %v1869, 5
        %v2315 = vrot.slane %v1869, 6
        %v2316 = vrot.slane %v1869, 7
        %v2317 = vrot.slane %v1870, 1
        %v2318 = vrot.slane %v1870, 2
        %v2319 = vrot.slane %v1870, 3
        %v2320 = vrot.slane %v1870, 4
        %v2321 = vrot.slane %v1870, 5
        %v2322 = vrot.slane %v1870, 6
        %v2323 = vrot.slane %v1870, 7
        %v2324 = vrot.slane %v1871, 1
        %v2325 = vrot.slane %v1871, 2
        %v2326 = vrot.slane %v1871, 3
        %v2327 = vrot.slane %v1871, 4
        %v2328 = vrot.slane %v1871, 5
        %v2329 = vrot.slane %v1871, 6
        %v2330 = vrot.slane %v1871, 7
        %v2331 = vrot.slane %v1872, 1
        %v2332 = vrot.slane %v1872, 2
        %v2333 = vrot.slane %v1872, 3
        %v2334 = vrot.slane %v1872, 4
        %v2335 = vrot.slane %v1872, 5
        %v2336 = vrot.slane %v1872, 6
        %v2337 = vrot.slane %v1872, 7
        %v2338 = vrot.slane %v1873, 1
        %v2339 = vrot.slane %v1873, 2
        %v2340 = vrot.slane %v1873, 3
        %v2341 = vrot.slane %v1873, 4
        %v2342 = vrot.slane %v1873, 5
        %v2343 = vrot.slane %v1873, 6
        %v2344 = vrot.slane %v1873, 7
        %v2345 = vrot.slane %v1874, 1
        %v2346 = vrot.slane %v1874, 2
        %v2347 = vrot.slane %v1874, 3
        %v2348 = vrot.slane %v1874, 4
        %v2349 = vrot.slane %v1874, 5
        %v2350 = vrot.slane %v1874, 6
        %v2351 = vrot.slane %v1874, 7
        %v2352 = vrot.slane %v1875, 1
        %v2353 = vrot.slane %v1875, 2
        %v2354 = vrot.slane %v1875, 3
        %v2355 = vrot.slane %v1875, 4
        %v2356 = vrot.slane %v1875, 5
        %v2357 = vrot.slane %v1875, 6
        %v2358 = vrot.slane %v1875, 7
        %v2359 = vrot.slane %v1876, 1
        %v2360 = vrot.slane %v1876, 2
        %v2361 = vrot.slane %v1876, 3
        %v2362 = vrot.slane %v1876, 4
        %v2363 = vrot.slane %v1876, 5
        %v2364 = vrot.slane %v1876, 6
        %v2365 = vrot.slane %v1876, 7
        %v2430 = vsub.f32 %v1995, %v1869
        %v2431 = vsub.f32 %v2001, %v2310
        %v2432 = vsub.f32 %v2007, %v2311
        %v2433 = vsub.f32 %v2013, %v2312
        %v2434 = vsub.f32 %v2019, %v2313
        %v2435 = vsub.f32 %v2025, %v2314
        %v2436 = vsub.f32 %v2031, %v2315
        %v2437 = vsub.f32 %v2037, %v2316
        %v2438 = vsub.f32 %v1995, %v1870
        %v2439 = vsub.f32 %v2001, %v2317
        %v2440 = vsub.f32 %v2007, %v2318
        %v2441 = vsub.f32 %v2013, %v2319
        %v2442 = vsub.f32 %v2019, %v2320
        %v2443 = vsub.f32 %v2025, %v2321
        %v2444 = vsub.f32 %v2031, %v2322
        %v2445 = vsub.f32 %v2037, %v2323
        %v2446 = vsub.f32 %v1995, %v1871
        %v2447 = vsub.f32 %v2001, %v2324
        %v2448 = vsub.f32 %v2007, %v2325
        %v2449 = vsub.f32 %v2013, %v2326
        %v2450 = vsub.f32 %v2019, %v2327
        %v2451 = vsub.f32 %v2025, %v2328
        %v2452 = vsub.f32 %v2031, %v2329
        %v2453 = vsub.f32 %v2037, %v2330
        %v2454 = vsub.f32 %v1995, %v1872
        %v2455 = vsub.f32 %v2001, %v2331
        %v2456 = vsub.f32 %v2007, %v2332
        %v2457 = vsub.f32 %v2013, %v2333
        %v2458 = vsub.f32 %v2019, %v2334
        %v2459 = vsub.f32 %v2025, %v2335
        %v2460 = vsub.f32 %v2031, %v2336
        %v2461 = vsub.f32 %v2037, %v2337
        %v2462 = vsub.f32 %v1995, %v1873
        %v2463 = vsub.f32 %v2001, %v2338
        %v2464 = vsub.f32 %v2007, %v2339
        %v2465 = vsub.f32 %v2013, %v2340
        %v2466 = vsub.f32 %v2019, %v2341
        %v2467 = vsub.f32 %v2025, %v2342
        %v2468 = vsub.f32 %v2031, %v2343
        %v2469 = vsub.f32 %v2037, %v2344
        %v2470 = vsub.f32 %v1995, %v1874
        %v2471 = vsub.f32 %v2001, %v2345
        %v2472 = vsub.f32 %v2007, %v2346
        %v2473 = vsub.f32 %v2013, %v2347
        %v2474 = vsub.f32 %v2019, %v2348
        %v2475 = vsub.f32 %v2025, %v2349
        %v2476 = vsub.f32 %v2031, %v2350
        %v2477 = vsub.f32 %v2037, %v2351
        %v2478 = vsub.f32 %v1995, %v1875
        %v2479 = vsub.f32 %v2001, %v2352
        %v2480 = vsub.f32 %v2007, %v2353
        %v2481 = vsub.f32 %v2013, %v2354
        %v2482 = vsub.f32 %v2019, %v2355
        %v2483 = vsub.f32 %v2025, %v2356
        %v2484 = vsub.f32 %v2031, %v2357
        %v2485 = vsub.f32 %v2037, %v2358
        %v2486 = vsub.f32 %v1995, %v1876
        %v2487 = vsub.f32 %v2001, %v2359
        %v2488 = vsub.f32 %v2007, %v2360
        %v2489 = vsub.f32 %v2013, %v2361
        %v2490 = vsub.f32 %v2019, %v2362
        %v2491 = vsub.f32 %v2025, %v2363
        %v2492 = vsub.f32 %v2031, %v2364
        %v2493 = vsub.f32 %v2037, %v2365
        %v2494 = vsub.f32 1.0, %v2144
        %v2495 = vsub.f32 1.0, %v2146
        %v2496 = vsub.f32 1.0, %v2148
        %v2497 = vsub.f32 1.0, %v2150
        %v2498 = vsub.f32 1.0, %v2152
        %v2499 = vsub.f32 1.0, %v2154
        %v2500 = vsub.f32 1.0, %v2156
        %v2501 = vsub.f32 1.0, %v2158
        %v2566 = vrot.slane %v2431, 7
        %v2567 = vsel %vm773, %v2566, %v2430
        %v2568 = vrot.slane %v2432, 6
        %v2569 = vsel %vm775, %v2568, %v2567
        %v2570 = vrot.slane %v2433, 5
        %v2571 = vsel %vm777, %v2570, %v2569
        %v2572 = vrot.slane %v2434, 4
        %v2573 = vsel %vm779, %v2572, %v2571
        %v2574 = vrot.slane %v2435, 3
        %v2575 = vsel %vm781, %v2574, %v2573
        %v2576 = vrot.slane %v2436, 2
        %v2577 = vsel %vm783, %v2576, %v2575
        %v2578 = vrot.slane %v2437, 1
        %v2579 = vsel %vm785, %v2578, %v2577
        %v2580 = vrot.slane %v2439, 7
        %v2581 = vsel %vm773, %v2580, %v2438
        %v2582 = vrot.slane %v2440, 6
        %v2583 = vsel %vm775, %v2582, %v2581
        %v2584 = vrot.slane %v2441, 5
        %v2585 = vsel %vm777, %v2584, %v2583
        %v2586 = vrot.slane %v2442, 4
        %v2587 = vsel %vm779, %v2586, %v2585
        %v2588 = vrot.slane %v2443, 3
        %v2589 = vsel %vm781, %v2588, %v2587
        %v2590 = vrot.slane %v2444, 2
        %v2591 = vsel %vm783, %v2590, %v2589
        %v2592 = vrot.slane %v2445, 1
        %v2593 = vsel %vm785, %v2592, %v2591
        %v2594 = vrot.slane %v2447, 7
        %v2595 = vsel %vm773, %v2594, %v2446
        %v2596 = vrot.slane %v2448, 6
        %v2597 = vsel %vm775, %v2596, %v2595
        %v2598 = vrot.slane %v2449, 5
        %v2599 = vsel %vm777, %v2598, %v2597
        %v2600 = vrot.slane %v2450, 4
        %v2601 = vsel %vm779, %v2600, %v2599
        %v2602 = vrot.slane %v2451, 3
        %v2603 = vsel %vm781, %v2602, %v2601
        %v2604 = vrot.slane %v2452, 2
        %v2605 = vsel %vm783, %v2604, %v2603
        %v2606 = vrot.slane %v2453, 1
        %v2607 = vsel %vm785, %v2606, %v2605
        %v2608 = vrot.slane %v2455, 7
        %v2609 = vsel %vm773, %v2608, %v2454
        %v2610 = vrot.slane %v2456, 6
        %v2611 = vsel %vm775, %v2610, %v2609
        %v2612 = vrot.slane %v2457, 5
        %v2613 = vsel %vm777, %v2612, %v2611
        %v2614 = vrot.slane %v2458, 4
        %v2615 = vsel %vm779, %v2614, %v2613
        %v2616 = vrot.slane %v2459, 3
        %v2617 = vsel %vm781, %v2616, %v2615
        %v2618 = vrot.slane %v2460, 2
        %v2619 = vsel %vm783, %v2618, %v2617
        %v2620 = vrot.slane %v2461, 1
        %v2621 = vsel %vm785, %v2620, %v2619
        %v2622 = vrot.slane %v2463, 7
        %v2623 = vsel %vm773, %v2622, %v2462
        %v2624 = vrot.slane %v2464, 6
        %v2625 = vsel %vm775, %v2624, %v2623
        %v2626 = vrot.slane %v2465, 5
        %v2627 = vsel %vm777, %v2626, %v2625
        %v2628 = vrot.slane %v2466, 4
        %v2629 = vsel %vm779, %v2628, %v2627
        %v2630 = vrot.slane %v2467, 3
        %v2631 = vsel %vm781, %v2630, %v2629
        %v2632 = vrot.slane %v2468, 2
        %v2633 = vsel %vm783, %v2632, %v2631
        %v2634 = vrot.slane %v2469, 1
        %v2635 = vsel %vm785, %v2634, %v2633
        %v2636 = vrot.slane %v2471, 7
        %v2637 = vsel %vm773, %v2636, %v2470
        %v2638 = vrot.slane %v2472, 6
        %v2639 = vsel %vm775, %v2638, %v2637
        %v2640 = vrot.slane %v2473, 5
        %v2641 = vsel %vm777, %v2640, %v2639
        %v2642 = vrot.slane %v2474, 4
        %v2643 = vsel %vm779, %v2642, %v2641
        %v2644 = vrot.slane %v2475, 3
        %v2645 = vsel %vm781, %v2644, %v2643
        %v2646 = vrot.slane %v2476, 2
        %v2647 = vsel %vm783, %v2646, %v2645
        %v2648 = vrot.slane %v2477, 1
        %v2649 = vsel %vm785, %v2648, %v2647
        %v2650 = vrot.slane %v2479, 7
        %v2651 = vsel %vm773, %v2650, %v2478
        %v2652 = vrot.slane %v2480, 6
        %v2653 = vsel %vm775, %v2652, %v2651
        %v2654 = vrot.slane %v2481, 5
        %v2655 = vsel %vm777, %v2654, %v2653
        %v2656 = vrot.slane %v2482, 4
        %v2657 = vsel %vm779, %v2656, %v2655
        %v2658 = vrot.slane %v2483, 3
        %v2659 = vsel %vm781, %v2658, %v2657
        %v2660 = vrot.slane %v2484, 2
        %v2661 = vsel %vm783, %v2660, %v2659
        %v2662 = vrot.slane %v2485, 1
        %v2663 = vsel %vm785, %v2662, %v2661
        %v2664 = vrot.slane %v2487, 7
        %v2665 = vsel %vm773, %v2664, %v2486
        %v2666 = vrot.slane %v2488, 6
        %v2667 = vsel %vm775, %v2666, %v2665
        %v2668 = vrot.slane %v2489, 5
        %v2669 = vsel %vm777, %v2668, %v2667
        %v2670 = vrot.slane %v2490, 4
        %v2671 = vsel %vm779, %v2670, %v2669
        %v2672 = vrot.slane %v2491, 3
        %v2673 = vsel %vm781, %v2672, %v2671
        %v2674 = vrot.slane %v2492, 2
        %v2675 = vsel %vm783, %v2674, %v2673
        %v2676 = vrot.slane %v2493, 1
        %v2677 = vsel %vm785, %v2676, %v2675
        %v2686 = vmul.f32 %v2494, %v2579
        %v2687 = vmul.f32 %v2495, %v2593
        %v2688 = vmul.f32 %v2496, %v2607
        %v2689 = vmul.f32 %v2497, %v2621
        %v2690 = vmul.f32 %v2498, %v2635
        %v2691 = vmul.f32 %v2499, %v2649
        %v2692 = vmul.f32 %v2500, %v2663
        %v2693 = vmul.f32 %v2501, %v2677
        %v2694 = vmul.f32 %v2144, %v2301
        %v2695 = vmul.f32 %v2146, %v2301
        %v2696 = vmul.f32 %v2148, %v2301
        %v2697 = vmul.f32 %v2150, %v2301
        %v2698 = vmul.f32 %v2152, %v2301
        %v2699 = vmul.f32 %v2154, %v2301
        %v2700 = vmul.f32 %v2156, %v2301
        %v2701 = vmul.f32 %v2158, %v2301
        %v2702 = vadd.f32 %v2686, %v2694
        %v2703 = vadd.f32 %v2687, %v2695
        %v2704 = vadd.f32 %v2688, %v2696
        %v2705 = vadd.f32 %v2689, %v2697
        %v2706 = vadd.f32 %v2690, %v2698
        %v2707 = vadd.f32 %v2691, %v2699
        %v2708 = vadd.f32 %v2692, %v2700
        %v2709 = vadd.f32 %v2693, %v2701
        %v2710 = vmul.f32 %v2702, %v348
        %v2711 = vmul.f32 %v2703, %v349
        %v2712 = vmul.f32 %v2704, %v350
        %v2713 = vmul.f32 %v2705, %v351
        %v2714 = vmul.f32 %v2706, %v352
        %v2715 = vmul.f32 %v2707, %v353
        %v2716 = vmul.f32 %v2708, %v354
        %v2717 = vmul.f32 %v2709, %v355
        %2718 = vst [vmem:[%s346] sm:$0xff] %v2710
        %2719 = vst [vmem:[%s346 + $0x8] sm:$0xff] %v2711
        %2720 = vst [vmem:[%s346 + $0x10] sm:$0xff] %v2712
        %2721 = vst [vmem:[%s346 + $0x18] sm:$0xff] %v2713
        %2722 = vst [vmem:[%s346 + $0x20] sm:$0xff] %v2714
        %2723 = vst [vmem:[%s346 + $0x28] sm:$0xff] %v2715
        %2724 = vst [vmem:[%s346 + $0x30] sm:$0xff] %v2716
        %2725 = vst [vmem:[%s346 + $0x38] sm:$0xff] %v2717
        %v2726 = vrot.slane %v2710, 4
        %v2727 = vadd.f32 %v2710, %v2726
        %v2728 = vrot.slane %v2727, 2
        %v2729 = vadd.f32 %v2727, %v2728
        %v2730 = vrot.slane %v2729, 1
        %v2731 = vadd.f32 %v2729, %v2730
        %v2732 = vrot.slane %v2711, 4
        %v2733 = vadd.f32 %v2711, %v2732
        %v2734 = vrot.slane %v2733, 2
        %v2735 = vadd.f32 %v2733, %v2734
        %v2736 = vrot.slane %v2735, 1
        %v2737 = vadd.f32 %v2735, %v2736
        %v2738 = vrot.slane %v2712, 4
        %v2739 = vadd.f32 %v2712, %v2738
        %v2740 = vrot.slane %v2739, 2
        %v2741 = vadd.f32 %v2739, %v2740
        %v2742 = vrot.slane %v2741, 1
        %v2743 = vadd.f32 %v2741, %v2742
        %v2744 = vrot.slane %v2713, 4
        %v2745 = vadd.f32 %v2713, %v2744
        %v2746 = vrot.slane %v2745, 2
        %v2747 = vadd.f32 %v2745, %v2746
        %v2748 = vrot.slane %v2747, 1
        %v2749 = vadd.f32 %v2747, %v2748
        %v2750 = vrot.slane %v2714, 4
        %v2751 = vadd.f32 %v2714, %v2750
        %v2752 = vrot.slane %v2751, 2
        %v2753 = vadd.f32 %v2751, %v2752
        %v2754 = vrot.slane %v2753, 1
        %v2755 = vadd.f32 %v2753, %v2754
        %v2756 = vrot.slane %v2715, 4
        %v2757 = vadd.f32 %v2715, %v2756
        %v2758 = vrot.slane %v2757, 2
        %v2759 = vadd.f32 %v2757, %v2758
        %v2760 = vrot.slane %v2759, 1
        %v2761 = vadd.f32 %v2759, %v2760
        %v2762 = vrot.slane %v2716, 4
        %v2763 = vadd.f32 %v2716, %v2762
        %v2764 = vrot.slane %v2763, 2
        %v2765 = vadd.f32 %v2763, %v2764
        %v2766 = vrot.slane %v2765, 1
        %v2767 = vadd.f32 %v2765, %v2766
        %v2768 = vrot.slane %v2717, 4
        %v2769 = vadd.f32 %v2717, %v2768
        %v2770 = vrot.slane %v2769, 2
        %v2771 = vadd.f32 %v2769, %v2770
        %v2772 = vrot.slane %v2771, 1
        %v2773 = vadd.f32 %v2771, %v2772
        %v2774 = vadd.f32 %v2710, %v2711
        %v2775 = vadd.f32 %v2774, %v2712
        %v2776 = vadd.f32 %v2775, %v2713
        %v2777 = vadd.f32 %v2776, %v2714
        %v2778 = vadd.f32 %v2777, %v2715
        %v2779 = vadd.f32 %v2778, %v2716
        %v2780 = vadd.f32 %v2779, %v2717
        %v2782 = vrot.slane %v2780, 1
        %v2783 = vrot.slane %v2780, 2
        %v2784 = vrot.slane %v2780, 3
        %v2785 = vrot.slane %v2780, 4
        %v2786 = vrot.slane %v2780, 5
        %v2787 = vrot.slane %v2780, 6
        %v2788 = vrot.slane %v2780, 7
        %v2797 = vadd.f32 %v2731, %v2780
        %v2798 = vadd.f32 %v2737, %v2782
        %v2799 = vadd.f32 %v2743, %v2783
        %v2800 = vadd.f32 %v2749, %v2784
        %v2801 = vadd.f32 %v2755, %v2785
        %v2802 = vadd.f32 %v2761, %v2786
        %v2803 = vadd.f32 %v2767, %v2787
        %v2804 = vadd.f32 %v2773, %v2788
        %v2813 = vrot.slane %v2798, 7
        %v2814 = vsel %vm773, %v2813, %v2797
        %v2815 = vrot.slane %v2799, 6
        %v2816 = vsel %vm775, %v2815, %v2814
        %v2817 = vrot.slane %v2800, 5
        %v2818 = vsel %vm777, %v2817, %v2816
        %v2819 = vrot.slane %v2801, 4
        %v2820 = vsel %vm779, %v2819, %v2818
        %v2821 = vrot.slane %v2802, 3
        %v2822 = vsel %vm781, %v2821, %v2820
        %v2823 = vrot.slane %v2803, 2
        %v2824 = vsel %vm783, %v2823, %v2822
        %v2825 = vrot.slane %v2804, 1
        %v2826 = vsel %vm785, %v2825, %v2824
        %2828 = vmatprep.subr.mxu0 0.0
        %2829 = vmatpush1.msra.mxu0 %v543
        %2830 = vmatprep.subr.mxu0 0.0
        %2831 = vmatpush1.msra.mxu0 %v547
        %2832 = vmatprep.subr.mxu0 0.0
        %2833 = vmatpush1.msra.mxu0 %v551
        %2834 = vmatprep.subr.mxu0 0.0
        %2835 = vmatpush1.msra.mxu0 %v555
        %2836 = vmatprep.subr.mxu0 0.0
        %2837 = vmatpush1.msra.mxu0 %v559
        %2838 = vmatprep.subr.mxu0 0.0
        %2839 = vmatpush1.msra.mxu0 %v563
        %2840 = vmatprep.subr.mxu0 0.0
        %2841 = vmatpush1.msra.mxu0 %v567
        %2842 = vmatprep.subr.mxu0 0.0
        %2843 = vmatpush1.msra.mxu0 %v571
        %2844 = vmatprep.subr.mxu0 0.0
        %2845 = vmatpush1.msra.mxu0 %v575
        %2846 = vmatprep.subr.mxu0 0.0
        %2847 = vmatpush1.msra.mxu0 %v579
        %2848 = vmatprep.subr.mxu0 0.0
        %2849 = vmatpush1.msra.mxu0 %v583
        %2850 = vmatprep.subr.mxu0 0.0
        %2851 = vmatpush1.msra.mxu0 %v587
        %2852 = vmatprep.subr.mxu0 0.0
        %2853 = vmatpush1.msra.mxu0 %v591
        %2854 = vmatprep.subr.mxu0 0.0
        %2855 = vmatpush1.msra.mxu0 %v595
        %2856 = vmatprep.subr.mxu0 0.0
        %2857 = vmatpush1.msra.mxu0 %v599
        %2858 = vmatprep.subr.mxu0 0.0
        %2859 = vmatpush1.msra.mxu0 %v603
        %2860 = vmatprep.subr.mxu0 0.0
        %2861 = vmatpush1.msra.mxu0 0.0
        %2862 = vmatprep.subr.mxu0 0.0
        %2863 = vmatpush1.msra.mxu0 0.0
        %2864 = vmatprep.subr.mxu0 0.0
        %2865 = vmatpush1.msra.mxu0 0.0
        %2866 = vmatprep.subr.mxu0 0.0
        %2867 = vmatpush1.msra.mxu0 0.0
        %2868 = vmatprep.subr.mxu0 0.0
        %2869 = vmatpush1.msra.mxu0 0.0
        %2870 = vmatprep.subr.mxu0 0.0
        %2871 = vmatpush1.msra.mxu0 0.0
        %2872 = vmatprep.subr.mxu0 0.0
        %2873 = vmatpush1.msra.mxu0 0.0
        %2874 = vmatprep.subr.mxu0 0.0
        %2875 = vmatpush1.msra.mxu0 0.0
        %2876 = vmatprep.subr.mxu0 0.0
        %2877 = vmatpush1.msra.mxu0 0.0
        %2878 = vmatprep.subr.mxu0 0.0
        %2879 = vmatpush1.msra.mxu0 0.0
        %2880 = vmatprep.subr.mxu0 0.0
        %2881 = vmatpush1.msra.mxu0 0.0
        %2882 = vmatprep.subr.mxu0 0.0
        %2883 = vmatpush1.msra.mxu0 0.0
        %2884 = vmatprep.subr.mxu0 0.0
        %2885 = vmatpush1.msra.mxu0 0.0
        %2886 = vmatprep.subr.mxu0 0.0
        %2887 = vmatpush1.msra.mxu0 0.0
        %2888 = vmatprep.subr.mxu0 0.0
        %2889 = vmatpush1.msra.mxu0 0.0
        %2890 = vmatprep.subr.mxu0 0.0
        %2891 = vmatpush1.msra.mxu0 0.0
        %2892 = vmatprep.mubr.f32.mxu0 0.0
        %2893 = vmatmul.mubr.f32.gmra.mrb[0].mxu0 %v2826
        %v2894 = vpop.f32.mrb[0].mxu0
        %v2895 = vadd.f32 0.0, %v2894
        %v2896 = vpop.f32.mrb[0].mxu0
        %2897 = vdwg.mxu0
        %v2898 = vadd.f32 %v538, %v2895
        %v2899 = vmax.f32 %v2898, 0.0
        %2900 = vst [vmem:[%s339] sm:$0xff] %v2899
        %s2901 = sand.u32 %s154, 1
        %s2902 = scalar_lea.sflag [#allocation4], %s2901
        %s2903 = sand.u32 %s154, 1
        %s2904 = smul.addr %s2903, 8
        %s2905 = scalar_lea.vmem [#allocation10], %s2904
        %s2906 = sand.u32 %s180, 1
        %s2907 = scalar_lea.sflag [#allocation12], %s2906
        %s2908 = sand.u32 %s180, 1
        %s2909 = smul.addr %s2908, 64
        %s2910 = scalar_lea.vmem [#allocation11], %s2909
        // Predicated region
        $region57: #{tpu_custom_call.1} parent=39 // pred_check
          %p2911 = pneg %p164
        $region58: #{tpu_custom_call.1} parent=39 // pred_check_branch
          %2913 = sbr.rel (%p2911) target = $region60
        $region59: #{tpu_custom_call.1} parent=39 // pred_region
          %s2915 = ssub.s32 128, 128
          %2916 = vsyncadd %s2902, %s2915
          %s2917 = smul.addr %s31, 128
          %s2918 = scalar_lea.hbm %s5, %s2917
          %s2920 = sshll.u32 %s2905, 4
          %s2921 = int_to_ptr.vmem [resolvable:$true] %s2920
          %2923 = dma.vmem_to_hbm [thread:$0]  %s2921, 128, %s2918, %s2902
        $region60: #{tpu_custom_call.1} parent=39 // pred_fallthru
          _
        // Predicated region
        $region61: #{tpu_custom_call.1} parent=39 // pred_check
          %p2924 = pneg %p190
        $region62: #{tpu_custom_call.1} parent=39 // pred_check_branch
          %2926 = sbr.rel (%p2924) target = $region64
        $region63: #{tpu_custom_call.1} parent=39 // pred_region
          %s2928 = ssub.s32 1024, 1024
          %2929 = vsyncadd %s2907, %s2928
          %s2930 = smul.addr %s31, 8
          %s2931 = smul.addr %s2930, 128
          %s2932 = scalar_lea.hbm %s6, %s2931
          %s2933 = sshll.u32 %s2910, 4
          %s2934 = int_to_ptr.vmem [resolvable:$true] %s2933
          %2939 = dma.vmem_to_hbm [thread:$0]  %s2934, 1024, %s2932, %s2907, 128, 128, 8
        $region64: #{tpu_custom_call.1} parent=39 // pred_fallthru
          _
      $region40: #{tpu_custom_call.1} parent=5 // pred_fallthru
        _
      %p2940 = scmp.le.s32.totalorder 2, %s26
      // Predicated region
      $region65: #{tpu_custom_call.1} parent=5 // pred_check
        %p2941 = pneg %p2940
      $region66: #{tpu_custom_call.1} parent=5 // pred_check_branch
        %2943 = sbr.rel (%p2941) target = $region68
      $region67: #{tpu_custom_call.1} parent=5 // pred_region
        %s2944 = ssub.s32 %s26, 2
        // Predicated region
        $region69: #{tpu_custom_call.1} parent=67 // pred_check
          %p2945 = pneg %p170
        $region70: #{tpu_custom_call.1} parent=67 // pred_check_branch
          %2947 = sbr.rel (%p2945) target = $region72
        $region71: #{tpu_custom_call.1} parent=67 // pred_region
          %s2948 = sand.u32 %s155, 1
          %s2949 = scalar_lea.sflag [#allocation4], %s2948
          %s2950 = sand.u32 %s155, 1
          %s2951 = smul.addr %s2950, 8
          %s2952 = scalar_lea.vmem [#allocation10], %s2951
          %2953 = dma.done %s2949, 128
        $region72: #{tpu_custom_call.1} parent=67 // pred_fallthru
          _
        // Predicated region
        $region73: #{tpu_custom_call.1} parent=67 // pred_check
          %p2954 = pneg %p196
        $region74: #{tpu_custom_call.1} parent=67 // pred_check_branch
          %2956 = sbr.rel (%p2954) target = $region76
        $region75: #{tpu_custom_call.1} parent=67 // pred_region
          %s2957 = sand.u32 %s181, 1
          %s2958 = scalar_lea.sflag [#allocation12], %s2957
          %s2959 = sand.u32 %s181, 1
          %s2960 = smul.addr %s2959, 64
          %s2961 = scalar_lea.vmem [#allocation11], %s2960
          %2962 = dma.done %s2958, 1024
        $region76: #{tpu_custom_call.1} parent=67 // pred_fallthru
          _
      $region68: #{tpu_custom_call.1} parent=5 // pred_fallthru
        _
    $region6: #{tpu_custom_call.1} parent=1 // loop_footer
      %s30 = sadd.s32 1, %s26
    $region7: #{tpu_custom_call.1} parent=1 // loop_footer_branch
      %25 = sbr.rel target = $region3
    $region8: #{tpu_custom_call.1} parent=1 // loop_exit
      _
    %2963 = vsyncpa [#allocation3], 1
    %s2964 = scalar_lea.sflag [#allocation3], 1
    %2965 = vsyncpa %s2964, 1
    %2966 = vsyncpa [#allocation6], 1
    %s2967 = scalar_lea.sflag [#allocation6], 1
    %2968 = vsyncpa %s2967, 1
    %2969 = vsyncpa [#allocation9], 1
    %2970 = vsyncpa [#allocation4], 1
    %s2971 = scalar_lea.sflag [#allocation4], 1
    %2972 = vsyncpa %s2971, 1
    %2973 = vsyncpa [#allocation12], 1
    %s2974 = scalar_lea.sflag [#allocation12], 1
    %2975 = vsyncpa %s2974, 1

</llo_original>
